<compile_context>
chip_gen: v5e
topology: v5e:2x2
jax: 0.10.0
libtpu: 0.0.40
codegen_flags: <defaults>
</compile_context>

<pallas_src>
import functools

import jax
import jax.numpy as jnp
from jax.experimental import pallas as pl
from jax.experimental.pallas import tpu as pltpu


_GN_EPS = 1e-5
_INV_SQRT2 = 0.7071067811865476


def _round_up(x, m):
    return -(-x // m) * m


# ---------------------------------------------------------------------------
# Device / pipeline capability probes (resolved once, outside any jit trace)
# ---------------------------------------------------------------------------

@functools.lru_cache(maxsize=None)
def _vmem_budget():
    """(vmem_limit_bytes, block_budget_bytes) derived from this device's VMEM."""
    cap = 64 * 1024 * 1024                              # conservative default (v7x)
    try:
        info = pltpu.get_tpu_info()
        c = int(getattr(info, "vmem_capacity_bytes", 0) or 0)
        if c > 0:
            cap = c
    except Exception:
        pass
    limit = max(32 * 1024 * 1024, min((cap * 3) // 4, 100 * 1024 * 1024))
    block_budget = int(limit * 0.6)                     # headroom for Mosaic scratch
    return limit, block_budget


def _probe_single_buffer_mode():
    """Return pl.Buffered(1) if this jax/Mosaic honors it, else None."""
    try:
        mode = pl.Buffered(1)

        def k(a_ref, c_ref, o_ref):
            o_ref[...] = a_ref[...] + c_ref[...]

        a = jnp.arange(16 * 128, dtype=jnp.float32).reshape(16, 128)
        c = jnp.ones((8, 128), jnp.float32)
        out = pl.pallas_call(
            k,
            out_shape=jax.ShapeDtypeStruct((16, 128), jnp.float32),
            grid=(2,),
            in_specs=[pl.BlockSpec((8, 128), lambda i: (i, 0)),
                      pl.BlockSpec((8, 128), lambda i: (0, 0), pipeline_mode=mode)],
            out_specs=pl.BlockSpec((8, 128), lambda i: (i, 0)),
        )(a, c)
        if bool(jnp.allclose(out, a + 1.0)):
            return mode
    except Exception:
        pass
    return None


_SINGLE_BUFFER = _probe_single_buffer_mode()


# ---------------------------------------------------------------------------
# In-kernel math helpers
# ---------------------------------------------------------------------------

def _erf_approx(x):
    # Abramowitz & Stegun 7.1.26 (|err| < 1.5e-7); exp routes to the EUP slot,
    # which is otherwise idle during the normalize/store pass.
    a1, a2, a3, a4, a5 = (0.254829592, -0.284496736, 1.421413741,
                          -1.453152027, 1.061405429)
    p = 0.3275911
    s = jnp.where(x >= 0.0, 1.0, -1.0)
    ax = jnp.abs(x)
    t = 1.0 / (1.0 + p * ax)          # exact reciprocal: keeps the 1.5e-7 bound
    poly = ((((a5 * t + a4) * t + a3) * t + a2) * t + a1) * t
    return s * (1.0 - poly * jnp.exp(-ax * ax))


def _gelu_exact(x):
    # nn.GELU() default = exact (erf-based) GELU.
    return 0.5 * x * (1.0 + _erf_approx(x * _INV_SQRT2))


# ---------------------------------------------------------------------------
# Fused  (matmul + bias) -> GroupNorm(num_groups=1) -> optional GELU  kernel
# ---------------------------------------------------------------------------

def _fused_matmul_gn_kernel(x_ref, w_ref, b_ref, g_ref, bt_ref, o_ref,
                            sum_ref, ssq_ref, *,
                            inv_count, apply_gelu, two_phase, pad_rows):
    """One conv->GN(1)->[GELU] block on a (row_tile, K) pixel tile.

    x_ref : (1, row_tile, K) bf16     w_ref : (K, C) bf16
    b_ref / g_ref / bt_ref : (1, C) f32 (bias / gamma / beta)
    o_ref : (1, row_tile, C) out dtype
    sum_ref / ssq_ref : (1, C) f32 per-sample partial sums (persist across the grid)
    """
    # bf16 MXU matmul, f32 accumulation.  In two-phase mode this runs in both phases;
    # the recompute replaces a full HBM write+read of the pre-norm activation.
    y = jnp.dot(x_ref[0], w_ref[...],
                preferred_element_type=jnp.float32) + b_ref[...]

    def normalize_store(total, total_sq):
        if pad_rows:
            # Zero-padded rows produce exactly `bias` per channel; subtract their
            # contribution analytically instead of masking every element.
            b = b_ref[...]
            total = total - pad_rows * jnp.sum(b)
            total_sq = total_sq - pad_rows * jnp.sum(b * b)
        mean = total * inv_count
        var = jnp.maximum(total_sq * inv_count - mean * mean, 0.0)   # biased, like GN
        scale = jax.lax.rsqrt(var + _GN_EPS) * g_ref[...]            # (1, C)
        shift = bt_ref[...] - mean * scale                           # (1, C)
        yn = y * scale + shift                                       # 1 FMA / element
        if apply_gelu:
            yn = _gelu_exact(yn)
        o_ref[0] = yn.astype(o_ref.dtype)

    if not two_phase:
        # Whole sample fits in one tile: single pass, no recompute, no scratch.
        normalize_store(jnp.sum(y), jnp.sum(y * y))
        return

    phase = pl.program_id(1)
    t = pl.program_id(2)

    @pl.when(jnp.logical_and(phase == 0, t == 0))
    def _():
        sum_ref[...] = jnp.zeros_like(sum_ref)
        ssq_ref[...] = jnp.zeros_like(ssq_ref)

    @pl.when(phase == 0)
    def _():
        sum_ref[...] += jnp.sum(y, axis=0, keepdims=True)
        ssq_ref[...] += jnp.sum(y * y, axis=0, keepdims=True)

    @pl.when(phase == 1)
    def _():
        normalize_store(jnp.sum(sum_ref[...]), jnp.sum(ssq_ref[...]))


def _pick_row_tile(P, K, C, out_bytes, max_rows):
    """VMEM-budget-driven pixel-tile size (multiple of 16; 128 when budget-bound)."""
    _, block_budget = _vmem_budget()
    p16 = _round_up(max(P, 1), 16)
    if max_rows is not None:
        return min(_round_up(max_rows, 16), p16)
    # Live VMEM per row: x tile (bf16, double-buffered) + f32 pre-norm y and
    # normalize/GELU temporaries (~5x) + output tile (double-buffered).
    per_row = 4 * K + 20 * C + 2 * out_bytes * C
    # Resident once: weight block (bf16, worst-case double-buffered) + small vectors.
    fixed = 4 * K * C + 64 * 1024
    avail = max(block_budget - fixed, 64 * per_row)
    budget_rows = avail // per_row
    if p16 <= budget_rows:
        return p16                                       # single-pass, whole sample
    if budget_rows >= 128:
        base = (budget_rows // 128) * 128
    else:
        base = max(16, (budget_rows // 16) * 16)
    base = min(base, p16)
    n_tiles = -(-P // base)
    return _round_up(-(-P // n_tiles), 16)               # balance tiles, minimal pad


def fused_matmul_gn(x, w, b, gamma, beta, *, apply_gelu, out_dtype, max_rows=None):
    """GroupNorm(1)(x @ w + b) [+ GELU], per sample, in one pallas_call.

    x: (N, P, K) pixels-by-features; w: (K, C); b/gamma/beta: (C,).
    Returns (N, P, C) of `out_dtype`.  `max_rows` forces a smaller tile (testing).
    """
    N, P, K = x.shape
    C = w.shape[1]
    out_bytes = int(jnp.dtype(out_dtype).itemsize)
    vmem_limit, _ = _vmem_budget()

    row_tile = _pick_row_tile(P, K, C, out_bytes, max_rows)
    num_tiles = -(-P // row_tile)
    p_pad = num_tiles * row_tile
    pad_rows = p_pad - P
    if pad_rows:
        x = jnp.pad(x, ((0, 0), (0, pad_rows), (0, 0)))
    two_phase = num_tiles > 1
    n_phases = 2 if two_phase else 1

    x = x.astype(jnp.bfloat16)
    w = w.astype(jnp.bfloat16)            # weights cast once, outside the kernel
    b = b.reshape(1, C).astype(jnp.float32)
    gamma = gamma.reshape(1, C).astype(jnp.float32)
    beta = beta.reshape(1, C).astype(jnp.float32)

    kernel = functools.partial(
        _fused_matmul_gn_kernel,
        inv_count=1.0 / float(P * C),
        apply_gelu=apply_gelu,
        two_phase=two_phase,
        pad_rows=pad_rows,
    )

    def const_spec(shape):
        idx = lambda n, ph, t: (0,) * len(shape)
        if _SINGLE_BUFFER is None:
            return pl.BlockSpec(shape, idx)
        # Constant-index operand: fetched once; single-buffer to halve its VMEM.
        return pl.BlockSpec(shape, idx, pipeline_mode=_SINGLE_BUFFER)

    cost = pl.CostEstimate(
        flops=2 * n_phases * N * p_pad * K * C,
        transcendentals=(2 * N * p_pad * C) if apply_gelu else N,
        bytes_accessed=(n_phases * N * p_pad * K * 2 + K * C * 2
                        + N * p_pad * C * out_bytes + 3 * C * 4),
    )

    # TODO(synk): shard row-tiles across v7x's two TensorCores (cross-core stats
    # combine) so batch=1 inference uses both cores; on v5e/v6e (1 TC) it is moot.
    out = pl.pallas_call(
        kernel,
        out_shape=jax.ShapeDtypeStruct((N, p_pad, C), out_dtype),
        grid=(N, n_phases, num_tiles),
        in_specs=[
            pl.BlockSpec((1, row_tile, K), lambda n, ph, t: (n, t, 0)),
            const_spec((K, C)),
            const_spec((1, C)),
            const_spec((1, C)),
            const_spec((1, C)),
        ],
        # Phase 0 never writes o_ref; its output block index is pinned to tile 0,
        # which is the first tile phase 1 legitimately writes, so every output
        # block's visits are consecutive and no unwritten block is ever flushed.
        out_specs=pl.BlockSpec((1, row_tile, C), lambda n, ph, t: (n, ph * t, 0)),
        scratch_shapes=[pltpu.VMEM((1, C), jnp.float32),
                        pltpu.VMEM((1, C), jnp.float32)],
        compiler_params=pltpu.CompilerParams(
            dimension_semantics=("parallel", "arbitrary", "arbitrary"),
            vmem_limit_bytes=vmem_limit,
        ),
        cost_estimate=cost,
    )(x, w, b, gamma, beta)

    if pad_rows:
        out = out[:, :P, :]
    return out


def _reference_matmul_gn(x, w, b, gamma, beta, *, apply_gelu, out_dtype):
    """Pure-JAX reference with the same dtype policy (bf16 matmul inputs, f32 math)."""
    xf = x.astype(jnp.bfloat16).astype(jnp.float32)
    wf = w.astype(jnp.bfloat16).astype(jnp.float32)
    y = jnp.einsum("npk,kc->npc", xf, wf) + b.astype(jnp.float32)
    mean = jnp.mean(y, axis=(1, 2), keepdims=True)
    var = jnp.var(y, axis=(1, 2), keepdims=True)
    yn = ((y - mean) * jax.lax.rsqrt(var + _GN_EPS) * gamma.astype(jnp.float32)
          + beta.astype(jnp.float32))
    if apply_gelu:
        yn = 0.5 * yn * (1.0 + jax.lax.erf(yn * _INV_SQRT2))
    return yn.astype(out_dtype)


# ---------------------------------------------------------------------------
# Fused conv blocks (patch/weight reshapes are tiny layout glue outside the kernel)
# ---------------------------------------------------------------------------

def convtranspose2x2_gn(x_flat, w, b, gamma, beta, *, apply_gelu, out_dtype,
                        mm=fused_matmul_gn):
    """nn.ConvTranspose2d(Cin,Cout,2,stride=2) + GroupNorm(1,Cout) [+ GELU], fused.

    x_flat: (N, P, Cin).  Returns (N, 4P, Cout); the new pixel axis is ordered
    (old_pixel, dh, dw) -- the true spatial interleave is deferred to the end of the
    branch (all intermediate ops are per-pixel channel projections).  w: (Cin,Cout,2,2).
    """
    N, P, Cin = x_flat.shape
    Cout = w.shape[1]
    w_cat = jnp.transpose(w, (0, 2, 3, 1)).reshape(Cin, 4 * Cout)  # cols = (dh,dw,co)
    y = mm(x_flat, w_cat, jnp.tile(b, 4), jnp.tile(gamma, 4), jnp.tile(beta, 4),
           apply_gelu=apply_gelu, out_dtype=out_dtype)
    return y.reshape(N, 4 * P, Cout)          # pure reshape, no data movement


def conv1x1_gn(x_flat, w, b, gamma, beta, *, apply_gelu, out_dtype,
               mm=fused_matmul_gn):
    """nn.Conv2d(Cin,Cout,1) + GroupNorm(1,Cout) [+ GELU], fused.  w: (Cout,Cin,1,1)."""
    Cout, Cin = w.shape[0], w.shape[1]
    return mm(x_flat, w.reshape(Cout, Cin).T, b, gamma, beta,
              apply_gelu=apply_gelu, out_dtype=out_dtype)


def conv2x2s2_gn(x_nhwc, w, b, gamma, beta, *, apply_gelu, out_dtype,
                 mm=fused_matmul_gn):
    """nn.Conv2d(Cin,Cout,2,stride=2) + GroupNorm(1,Cout) [+ GELU], fused.

    x_nhwc: (N,H,W,Cin).  Returns (N, (H//2)*(W//2), Cout).  w: (Cout,Cin,2,2).
    """
    N, H, W, Cin = x_nhwc.shape
    Cout = w.shape[0]
    Ho, Wo = H // 2, W // 2
    # TODO(synk): pack the 2x2 patches inside the kernel (two dh-sliced matmuls over
    # an in-VMEM reshaped block) to avoid this out-of-kernel HBM transpose copy.
    patches = x_nhwc.reshape(N, Ho, 2, Wo, 2, Cin)
    patches = patches.transpose(0, 1, 3, 2, 4, 5).reshape(N, Ho * Wo, 4 * Cin)
    wm = jnp.transpose(w, (2, 3, 1, 0)).reshape(4 * Cin, Cout)    # rows = (dh,dw,ci)
    return mm(patches, wm, b, gamma, beta, apply_gelu=apply_gelu, out_dtype=out_dtype)


# ---------------------------------------------------------------------------
# SimpleFPN parameters + forward
# ---------------------------------------------------------------------------

def init_simple_fpn_params(key, in_dim, out_dims):
    keys = iter(jax.random.split(key, 64))

    def w(shape, scale=0.05):
        return jax.random.normal(next(keys), shape, jnp.float32) * scale

    def bias(n):
        return jax.random.normal(next(keys), (n,), jnp.float32) * 0.01

    def gn(n):
        g = 1.0 + jax.random.normal(next(keys), (n,), jnp.float32) * 0.01
        b = jax.random.normal(next(keys), (n,), jnp.float32) * 0.01
        return g, b

    c4 = max(out_dims[0] * 2, in_dim // 2)
    c8 = max(out_dims[1], in_dim // 2)
    c32 = max(out_dims[3], in_dim * 2)

    p = {}
    # down_4: ConvT -> GN -> GELU -> ConvT -> GN -> Conv1x1 -> GN -> GELU
    p["d4_ct1_w"], p["d4_ct1_b"] = w((in_dim, c4, 2, 2)), bias(c4)
    p["d4_gn1_g"], p["d4_gn1_b"] = gn(c4)
    p["d4_ct2_w"], p["d4_ct2_b"] = w((c4, c4 // 2, 2, 2)), bias(c4 // 2)
    p["d4_gn2_g"], p["d4_gn2_b"] = gn(c4 // 2)
    p["d4_c_w"], p["d4_c_b"] = w((out_dims[0], c4 // 2, 1, 1)), bias(out_dims[0])
    p["d4_gn3_g"], p["d4_gn3_b"] = gn(out_dims[0])
    # down_8: ConvT -> GN -> Conv1x1 -> GN -> GELU
    p["d8_ct_w"], p["d8_ct_b"] = w((in_dim, c8, 2, 2)), bias(c8)
    p["d8_gn1_g"], p["d8_gn1_b"] = gn(c8)
    p["d8_c_w"], p["d8_c_b"] = w((out_dims[1], c8, 1, 1)), bias(out_dims[1])
    p["d8_gn2_g"], p["d8_gn2_b"] = gn(out_dims[1])
    # down_16: Conv1x1 -> GN -> GELU
    p["d16_c_w"], p["d16_c_b"] = w((out_dims[2], in_dim, 1, 1)), bias(out_dims[2])
    p["d16_gn_g"], p["d16_gn_b"] = gn(out_dims[2])
    # down_32: Conv2x2s2 -> GN -> Conv1x1 -> GN -> GELU
    p["d32_c1_w"], p["d32_c1_b"] = w((c32, in_dim, 2, 2)), bias(c32)
    p["d32_gn1_g"], p["d32_gn1_b"] = gn(c32)
    p["d32_c2_w"], p["d32_c2_b"] = w((out_dims[3], c32, 1, 1)), bias(out_dims[3])
    p["d32_gn2_g"], p["d32_gn2_b"] = gn(out_dims[3])
    return p


def simple_fpn_forward(params, x_nchw, mm=fused_matmul_gn):
    p = params
    N, Cin, H, W = x_nchw.shape

    # Single NCHW -> NHWC transpose of the input, done once and in bf16.
    x_nhwc = jnp.transpose(x_nchw, (0, 2, 3, 1)).astype(jnp.bfloat16)
    x_flat = x_nhwc.reshape(N, H * W, Cin)

    inter = jnp.bfloat16     # intermediate activations (halves HBM traffic)
    final = jnp.float32      # branch outputs stay f32 (PyTorch parity)

    # ---- down_4 (x4 upsample) -------------------------------------------------
    y = convtranspose2x2_gn(x_flat, p["d4_ct1_w"], p["d4_ct1_b"],
                            p["d4_gn1_g"], p["d4_gn1_b"],
                            apply_gelu=True, out_dtype=inter, mm=mm)   # (N, 4HW, c4)
    y = convtranspose2x2_gn(y, p["d4_ct2_w"], p["d4_ct2_b"],
                            p["d4_gn2_g"], p["d4_gn2_b"],
                            apply_gelu=False, out_dtype=inter, mm=mm)  # (N,16HW,c4//2)
    y = conv1x1_gn(y, p["d4_c_w"], p["d4_c_b"], p["d4_gn3_g"], p["d4_gn3_b"],
                   apply_gelu=True, out_dtype=final, mm=mm)            # (N,16HW,out0)
    C0 = y.shape[-1]
    # TODO(synk): emit NHWC / bf16 through these pixel-shuffle transposes if the
    # consumer allows; kept f32 NCHW here for exact PyTorch output parity.
    # pixel order along 16HW is (h, w, dh1, dw1, dh2, dw2); one transpose to NCHW.
    x4 = (y.reshape(N, H, W, 2, 2, 2, 2, C0)
            .transpose(0, 7, 1, 3, 5, 2, 4, 6)
            .reshape(N, C0, 4 * H, 4 * W))

    # ---- down_8 (x2 upsample) -------------------------------------------------
    y = convtranspose2x2_gn(x_flat, p["d8_ct_w"], p["d8_ct_b"],
                            p["d8_gn1_g"], p["d8_gn1_b"],
                            apply_gelu=False, out_dtype=inter, mm=mm)  # (N, 4HW, c8)
    y = conv1x1_gn(y, p["d8_c_w"], p["d8_c_b"], p["d8_gn2_g"], p["d8_gn2_b"],
                   apply_gelu=True, out_dtype=final, mm=mm)            # (N, 4HW, out1)
    C1 = y.shape[-1]
    x8 = (y.reshape(N, H, W, 2, 2, C1)
            .transpose(0, 5, 1, 3, 2, 4)
            .reshape(N, C1, 2 * H, 2 * W))

    # ---- down_16 (same resolution) --------------------------------------------
    y = conv1x1_gn(x_flat, p["d16_c_w"], p["d16_c_b"], p["d16_gn_g"], p["d16_gn_b"],
                   apply_gelu=True, out_dtype=final, mm=mm)            # (N, HW, out2)
    C2 = y.shape[-1]
    x16 = y.reshape(N, H, W, C2).transpose(0, 3, 1, 2)

    # ---- down_32 (x2 downsample) ----------------------------------------------
    y = conv2x2s2_gn(x_nhwc, p["d32_c1_w"], p["d32_c1_b"],
                     p["d32_gn1_g"], p["d32_gn1_b"],
                     apply_gelu=False, out_dtype=inter, mm=mm)         # (N, HW/4, c32)
    y = conv1x1_gn(y, p["d32_c2_w"], p["d32_c2_b"], p["d32_gn2_g"], p["d32_gn2_b"],
                   apply_gelu=True, out_dtype=final, mm=mm)            # (N, HW/4, out3)
    C3 = y.shape[-1]
    x32 = y.reshape(N, H // 2, W // 2, C3).transpose(0, 3, 1, 2)

    return [x4, x8, x16, x32]


# ---------------------------------------------------------------------------

if __name__ == "__main__":
    # Small shapes consistent with the module (scaled-down in_dim / out_dims).
    in_dim = 32
    out_dims = [8, 16, 32, 64]
    batch, H, W = 2, 16, 16

    key = jax.random.PRNGKey(0)
    kx, kp, kt = jax.random.split(key, 3)
    x = jax.random.normal(kx, (batch, in_dim, H, W), jnp.float32)  # NCHW
    params = init_simple_fpn_params(kp, in_dim, out_dims)

    # --- unit check of the fused kernel: single-pass vs forced two-phase vs ref ----
    k1, k2, k3, k4, k5 = jax.random.split(kt, 5)
    Pt, Kt, Ct = 300, 64, 96        # P not a multiple of 16 -> exercises pad correction
    xt = jax.random.normal(k1, (2, Pt, Kt), jnp.float32)
    wt = jax.random.normal(k2, (Kt, Ct), jnp.float32) * 0.1
    bt = jax.random.normal(k3, (Ct,), jnp.float32) * 0.1
    gt = 1.0 + 0.1 * jax.random.normal(k4, (Ct,), jnp.float32)
    bet = 0.1 * jax.random.normal(k5, (Ct,), jnp.float32)

    ref = _reference_matmul_gn(xt, wt, bt, gt, bet,
                               apply_gelu=True, out_dtype=jnp.float32)
    one = fused_matmul_gn(xt, wt, bt, gt, bet,
                          apply_gelu=True, out_dtype=jnp.float32)
    two = fused_matmul_gn(xt, wt, bt, gt, bet,
                          apply_gelu=True, out_dtype=jnp.float32,
                          max_rows=64)   # force the two-phase / multi-tile path
    jax.block_until_ready((one, two))
    assert bool(jnp.allclose(one, ref, atol=5e-2, rtol=5e-2)), "single-pass mismatch"
    assert bool(jnp.allclose(two, ref, atol=5e-2, rtol=5e-2)), "two-phase mismatch"
    assert bool(jnp.allclose(one, two, atol=1e-2, rtol=1e-2)), "path mismatch"

    # --- full forward ---------------------------------------------------------------
    fwd = jax.jit(simple_fpn_forward)
    outs = jax.block_until_ready(fwd(params, x))
    refs = simple_fpn_forward(params, x, mm=_reference_matmul_gn)  # pure-JAX reference

    expected = [
        (batch, out_dims[0], 4 * H, 4 * W),
        (batch, out_dims[1], 2 * H, 2 * W),
        (batch, out_dims[2], H, W),
        (batch, out_dims[3], H // 2, W // 2),
    ]
    got = [tuple(o.shape) for o in outs]
    assert got == expected, got
    assert all(o.dtype == jnp.float32 for o in outs)
    assert all(bool(jnp.all(jnp.isfinite(o))) for o in outs)
    for o, r in zip(outs, refs):
        assert bool(jnp.allclose(o, r, atol=5e-2, rtol=5e-2)), "forward mismatch"
    print("KERNEL_OK")
</pallas_src>

<mosaic_0001>
module attributes {stable_mosaic.version = 11 : i64} {
  func.func @k(%arg0: i32, %arg1: memref<8x128xf32, #tpu.memory_space<vmem>>, %arg2: memref<8x128xf32, #tpu.memory_space<vmem>>, %arg3: memref<8x128xf32, #tpu.memory_space<vmem>>) attributes {dimension_semantics = [#tpu.dimension_semantics<arbitrary>], iteration_bounds = array<i64: 2>, scalar_prefetch = 0 : i64, scratch_operands = 0 : i64, tpu.core_type = #tpu.core_type<tc>, window_params = [{transform_indices = @transform_0, window_bounds = array<i64: 8, 128>}, {pipeline_mode = #tpu.pipeline_mode<synchronous>, transform_indices = @transform_1, window_bounds = array<i64: 8, 128>}, {transform_indices = @transform_2, window_bounds = array<i64: 8, 128>}]} {
    %c0 = arith.constant 0 : index
    %c0_0 = arith.constant 0 : index
    %0 = vector.load %arg1[%c0, %c0_0] : memref<8x128xf32, #tpu.memory_space<vmem>>, vector<8x128xf32>
    %c0_1 = arith.constant 0 : index
    %c0_2 = arith.constant 0 : index
    %1 = vector.load %arg2[%c0_1, %c0_2] : memref<8x128xf32, #tpu.memory_space<vmem>>, vector<8x128xf32>
    %2 = arith.addf %0, %1 : vector<8x128xf32>
    %c0_3 = arith.constant 0 : index
    %c0_4 = arith.constant 0 : index
    %3 = vector.load %arg3[%c0_3, %c0_4] : memref<8x128xf32, #tpu.memory_space<vmem>>, vector<8x128xf32>
    tpu.vector_store %arg3[%c0_3, %c0_4], %2 {strides = array<i32>} : memref<8x128xf32, #tpu.memory_space<vmem>>, vector<8x128xf32>,
    return
  }
  func.func @transform_0(%arg0: i32) -> (i32, i32) {
    %c0_i32 = arith.constant 0 : i32
    %c0_i32_0 = arith.constant 0 : i32
    return %arg0, %c0_i32 : i32, i32
  }
  func.func @transform_1(%arg0: i32) -> (i32, i32) {
    %c0_i32 = arith.constant 0 : i32
    %c0_i32_0 = arith.constant 0 : i32
    %c0_i32_1 = arith.constant 0 : i32
    return %c0_i32, %c0_i32_0 : i32, i32
  }
  func.func @transform_2(%arg0: i32) -> (i32, i32) {
    %c0_i32 = arith.constant 0 : i32
    %c0_i32_0 = arith.constant 0 : i32
    return %arg0, %c0_i32 : i32, i32
  }
}

module attributes {stable_mosaic.version = 11 : i64} {
  func.func @_fused_matmul_gn_kernel(%arg0: i32, %arg1: i32, %arg2: i32, %arg3: memref<1x304x64xbf16, #tpu.memory_space<vmem>>, %arg4: memref<64x96xbf16, #tpu.memory_space<vmem>>, %arg5: memref<1x96xf32, #tpu.memory_space<vmem>>, %arg6: memref<1x96xf32, #tpu.memory_space<vmem>>, %arg7: memref<1x96xf32, #tpu.memory_space<vmem>>, %arg8: memref<1x304x96xf32, #tpu.memory_space<vmem>>, %arg9: memref<1x96xf32, #tpu.memory_space<vmem>>, %arg10: memref<1x96xf32, #tpu.memory_space<vmem>>) attributes {dimension_semantics = [#tpu.dimension_semantics<parallel>, #tpu.dimension_semantics<arbitrary>, #tpu.dimension_semantics<arbitrary>], iteration_bounds = array<i64: 2, 1, 1>, scalar_prefetch = 0 : i64, scratch_operands = 2 : i64, tpu.core_type = #tpu.core_type<tc>, window_params = [{transform_indices = @transform_0, window_bounds = array<i64: 1, 304, 64>}, {pipeline_mode = #tpu.pipeline_mode<synchronous>, transform_indices = @transform_1, window_bounds = array<i64: 64, 96>}, {pipeline_mode = #tpu.pipeline_mode<synchronous>, transform_indices = @transform_2, window_bounds = array<i64: 1, 96>}, {pipeline_mode = #tpu.pipeline_mode<synchronous>, transform_indices = @transform_3, window_bounds = array<i64: 1, 96>}, {pipeline_mode = #tpu.pipeline_mode<synchronous>, transform_indices = @transform_4, window_bounds = array<i64: 1, 96>}, {transform_indices = @transform_5, window_bounds = array<i64: 1, 304, 96>}]} {
    %c0 = arith.constant 0 : index
    %c0_0 = arith.constant 0 : index
    %c0_1 = arith.constant 0 : index
    %0 = vector.load %arg3[%c0, %c0_0, %c0_1] : memref<1x304x64xbf16, #tpu.memory_space<vmem>>, vector<1x304x64xbf16>
    %1 = vector.shape_cast %0 : vector<1x304x64xbf16> to vector<304x64xbf16>
    %c0_2 = arith.constant 0 : index
    %c0_3 = arith.constant 0 : index
    %2 = vector.load %arg4[%c0_2, %c0_3] : memref<64x96xbf16, #tpu.memory_space<vmem>>, vector<64x96xbf16>
    %cst = arith.constant dense<0.000000e+00> : vector<304x96xf32>
    %3 = tpu.matmul %1, %2, %cst {dimension_numbers = #tpu.dot_dimension_numbers<[1], [0], [0], [1], [0, 0, 1, 1], [], []>} : vector<304x64xbf16>, vector<64x96xbf16>, vector<304x96xf32> -> vector<304x96xf32>
    %c0_4 = arith.constant 0 : index
    %c0_5 = arith.constant 0 : index
    %4 = vector.load %arg5[%c0_4, %c0_5] : memref<1x96xf32, #tpu.memory_space<vmem>>, vector<1x96xf32>
    %5 = vector.broadcast %4 : vector<1x96xf32> to vector<304x96xf32>
    %6 = arith.addf %3, %5 : vector<304x96xf32>
    %7 = vector.shape_cast %6 : vector<304x96xf32> to vector<1x304x96xf32>
    %cst_6 = arith.constant dense<0.000000e+00> : vector<1xf32>
    %8 = vector.multi_reduction <add>, %7, %cst_6 [1, 2] : vector<1x304x96xf32> to vector<1xf32>
    %9 = vector.shape_cast %8 : vector<1xf32> to vector<1x1x1xf32>
    %10 = vector.extract %9[0, 0, 0] : f32 from vector<1x1x1xf32>
    %11 = arith.mulf %6, %6 : vector<304x96xf32>
    %12 = vector.shape_cast %11 : vector<304x96xf32> to vector<1x304x96xf32>
    %cst_7 = arith.constant dense<0.000000e+00> : vector<1xf32>
    %13 = vector.multi_reduction <add>, %12, %cst_7 [1, 2] : vector<1x304x96xf32> to vector<1xf32>
    %14 = vector.shape_cast %13 : vector<1xf32> to vector<1x1x1xf32>
    %15 = vector.extract %14[0, 0, 0] : f32 from vector<1x1x1xf32>
    %c0_8 = arith.constant 0 : index
    %c0_9 = arith.constant 0 : index
    %16 = vector.load %arg5[%c0_8, %c0_9] : memref<1x96xf32, #tpu.memory_space<vmem>>, vector<1x96xf32>
    %17 = vector.shape_cast %16 : vector<1x96xf32> to vector<1x1x96xf32>
    %cst_10 = arith.constant dense<0.000000e+00> : vector<1xf32>
    %18 = vector.multi_reduction <add>, %17, %cst_10 [1, 2] : vector<1x1x96xf32> to vector<1xf32>
    %19 = vector.shape_cast %18 : vector<1xf32> to vector<1x1x1xf32>
    %20 = vector.extract %19[0, 0, 0] : f32 from vector<1x1x1xf32>
    %cst_11 = arith.constant 4.000000e+00 : f32
    %21 = arith.mulf %cst_11, %20 : f32
    %22 = arith.subf %10, %21 : f32
    %23 = arith.mulf %16, %16 : vector<1x96xf32>
    %24 = vector.shape_cast %23 : vector<1x96xf32> to vector<1x1x96xf32>
    %cst_12 = arith.constant dense<0.000000e+00> : vector<1xf32>
    %25 = vector.multi_reduction <add>, %24, %cst_12 [1, 2] : vector<1x1x96xf32> to vector<1xf32>
    %26 = vector.shape_cast %25 : vector<1xf32> to vector<1x1x1xf32>
    %27 = vector.extract %26[0, 0, 0] : f32 from vector<1x1x1xf32>
    %cst_13 = arith.constant 4.000000e+00 : f32
    %28 = arith.mulf %cst_13, %27 : f32
    %29 = arith.subf %15, %28 : f32
    %cst_14 = arith.constant 3.47222231E-5 : f32
    %30 = arith.mulf %22, %cst_14 : f32
    %cst_15 = arith.constant 3.47222231E-5 : f32
    %31 = arith.mulf %29, %cst_15 : f32
    %32 = arith.mulf %30, %30 : f32
    %33 = arith.subf %31, %32 : f32
    %cst_16 = arith.constant 0.000000e+00 : f32
    %34 = arith.maximumf %33, %cst_16 : f32
    %cst_17 = arith.constant 9.99999974E-6 : f32
    %35 = arith.addf %34, %cst_17 : f32
    %36 = math.rsqrt %35 : f32
    %c0_18 = arith.constant 0 : index
    %c0_19 = arith.constant 0 : index
    %37 = vector.load %arg6[%c0_18, %c0_19] : memref<1x96xf32, #tpu.memory_space<vmem>>, vector<1x96xf32>
    %38 = vector.broadcast %36 : f32 to vector<1x96xf32>
    %39 = arith.mulf %38, %37 : vector<1x96xf32>
    %c0_20 = arith.constant 0 : index
    %c0_21 = arith.constant 0 : index
    %40 = vector.load %arg7[%c0_20, %c0_21] : memref<1x96xf32, #tpu.memory_space<vmem>>, vector<1x96xf32>
    %41 = vector.broadcast %30 : f32 to vector<1x96xf32>
    %42 = arith.mulf %41, %39 : vector<1x96xf32>
    %43 = arith.subf %40, %42 : vector<1x96xf32>
    %44 = vector.broadcast %39 : vector<1x96xf32> to vector<304x96xf32>
    %45 = arith.mulf %6, %44 : vector<304x96xf32>
    %46 = vector.broadcast %43 : vector<1x96xf32> to vector<304x96xf32>
    %47 = arith.addf %45, %46 : vector<304x96xf32>
    %cst_22 = arith.constant 5.000000e-01 : f32
    %48 = vector.broadcast %cst_22 : f32 to vector<304x96xf32>
    %49 = arith.mulf %48, %47 : vector<304x96xf32>
    %cst_23 = arith.constant 0.707106769 : f32
    %50 = vector.broadcast %cst_23 : f32 to vector<304x96xf32>
    %51 = arith.mulf %47, %50 : vector<304x96xf32>
    %cst_24 = arith.constant 0.000000e+00 : f32
    %52 = vector.broadcast %cst_24 : f32 to vector<304x96xf32>
    %53 = arith.cmpf oge, %51, %52 : vector<304x96xf32>
    %cst_25 = arith.constant 1.000000e+00 : f32
    %cst_26 = arith.constant -1.000000e+00 : f32
    %54 = vector.broadcast %cst_25 : f32 to vector<304x96xf32>
    %55 = vector.broadcast %cst_26 : f32 to vector<304x96xf32>
    %56 = arith.select %53, %54, %55 : vector<304x96xi1>, vector<304x96xf32>
    %57 = math.absf %51 : vector<304x96xf32>
    %cst_27 = arith.constant 0.327591091 : f32
    %58 = vector.broadcast %cst_27 : f32 to vector<304x96xf32>
    %59 = arith.mulf %58, %57 : vector<304x96xf32>
    %cst_28 = arith.constant 1.000000e+00 : f32
    %60 = vector.broadcast %cst_28 : f32 to vector<304x96xf32>
    %61 = arith.addf %60, %59 : vector<304x96xf32>
    %cst_29 = arith.constant 1.000000e+00 : f32
    %62 = vector.broadcast %cst_29 : f32 to vector<304x96xf32>
    %63 = arith.divf %62, %61 : vector<304x96xf32>
    %cst_30 = arith.constant 1.06140542 : f32
    %64 = vector.broadcast %cst_30 : f32 to vector<304x96xf32>
    %65 = arith.mulf %64, %63 : vector<304x96xf32>
    %cst_31 = arith.constant -1.45315206 : f32
    %66 = vector.broadcast %cst_31 : f32 to vector<304x96xf32>
    %67 = arith.addf %65, %66 : vector<304x96xf32>
    %68 = arith.mulf %67, %63 : vector<304x96xf32>
    %cst_32 = arith.constant 1.42141378 : f32
    %69 = vector.broadcast %cst_32 : f32 to vector<304x96xf32>
    %70 = arith.addf %68, %69 : vector<304x96xf32>
    %71 = arith.mulf %70, %63 : vector<304x96xf32>
    %cst_33 = arith.constant -0.284496725 : f32
    %72 = vector.broadcast %cst_33 : f32 to vector<304x96xf32>
    %73 = arith.addf %71, %72 : vector<304x96xf32>
    %74 = arith.mulf %73, %63 : vector<304x96xf32>
    %cst_34 = arith.constant 0.254829586 : f32
    %75 = vector.broadcast %cst_34 : f32 to vector<304x96xf32>
    %76 = arith.addf %74, %75 : vector<304x96xf32>
    %77 = arith.mulf %76, %63 : vector<304x96xf32>
    %cst_35 = arith.constant 0.000000e+00 : f32
    %78 = vector.broadcast %cst_35 : f32 to vector<304x96xf32>
    %79 = arith.subf %78, %57 : vector<304x96xf32>
    %80 = arith.mulf %79, %57 : vector<304x96xf32>
    %81 = math.exp %80 : vector<304x96xf32>
    %82 = arith.mulf %77, %81 : vector<304x96xf32>
    %cst_36 = arith.constant 1.000000e+00 : f32
    %83 = vector.broadcast %cst_36 : f32 to vector<304x96xf32>
    %84 = arith.subf %83, %82 : vector<304x96xf32>
    %85 = arith.mulf %56, %84 : vector<304x96xf32>
    %cst_37 = arith.constant 1.000000e+00 : f32
    %86 = vector.broadcast %cst_37 : f32 to vector<304x96xf32>
    %87 = arith.addf %86, %85 : vector<304x96xf32>
    %88 = arith.mulf %49, %87 : vector<304x96xf32>
    %c0_38 = arith.constant 0 : index
    %c0_39 = arith.constant 0 : index
    %c0_40 = arith.constant 0 : index
    %89 = vector.load %arg8[%c0_38, %c0_39, %c0_40] : memref<1x304x96xf32, #tpu.memory_space<vmem>>, vector<1x304x96xf32>
    %90 = vector.shape_cast %89 : vector<1x304x96xf32> to vector<304x96xf32>
    %91 = vector.shape_cast %88 : vector<304x96xf32> to vector<1x304x96xf32>
    tpu.vector_store %arg8[%c0_38, %c0_39, %c0_40], %91 {strides = array<i32>} : memref<1x304x96xf32, #tpu.memory_space<vmem>>, vector<1x304x96xf32>,
    return
  }
  func.func @transform_0(%arg0: i32, %arg1: i32, %arg2: i32) -> (i32, i32, i32) {
    %c0_i32 = arith.constant 0 : i32
    %c0_i32_0 = arith.constant 0 : i32
    return %arg0, %arg2, %c0_i32 : i32, i32, i32
  }
  func.func @transform_1(%arg0: i32, %arg1: i32, %arg2: i32) -> (i32, i32) {
    %c0_i32 = arith.constant 0 : i32
    %c0_i32_0 = arith.constant 0 : i32
    %c0_i32_1 = arith.constant 0 : i32
    return %c0_i32, %c0_i32_0 : i32, i32
  }
  func.func @transform_2(%arg0: i32, %arg1: i32, %arg2: i32) -> (i32, i32) {
    %c0_i32 = arith.constant 0 : i32
    %c0_i32_0 = arith.constant 0 : i32
    %c0_i32_1 = arith.constant 0 : i32
    return %c0_i32, %c0_i32_0 : i32, i32
  }
  func.func @transform_3(%arg0: i32, %arg1: i32, %arg2: i32) -> (i32, i32) {
    %c0_i32 = arith.constant 0 : i32
    %c0_i32_0 = arith.constant 0 : i32
    %c0_i32_1 = arith.constant 0 : i32
    return %c0_i32, %c0_i32_0 : i32, i32
  }
  func.func @transform_4(%arg0: i32, %arg1: i32, %arg2: i32) -> (i32, i32) {
    %c0_i32 = arith.constant 0 : i32
    %c0_i32_0 = arith.constant 0 : i32
    %c0_i32_1 = arith.constant 0 : i32
    return %c0_i32, %c0_i32_0 : i32, i32
  }
  func.func @transform_5(%arg0: i32, %arg1: i32, %arg2: i32) -> (i32, i32, i32) {
    %0 = arith.muli %arg1, %arg2 : i32
    %c0_i32 = arith.constant 0 : i32
    %c0_i32_0 = arith.constant 0 : i32
    return %arg0, %0, %c0_i32 : i32, i32, i32
  }
}

</mosaic_0001>

<llo_original>
// kernel: tpu_custom_call.1
$region0: #{tpu_custom_call.1}
  #allocation0 [shape = 'u32[]', space=smem, size = 0x4, offset = 0x4, fixed_abs, tag = 'smem constant byte address 0x4 - core index']
  #allocation1 [shape = 'u32[72,128]{1,0:T(1,128)}', space=vmem, size = 0x9000, scoped, tag = 'internal scratch']
  %s0 = inlined_call_operand.hbm [shape: f32[16,128], index: 0, kind: input, shape index: {}]
  %s1 = inlined_call_operand.hbm [shape: f32[8,128], index: 1, kind: input, shape index: {}]
  %s2 = inlined_call_operand.hbm [shape: f32[16,128], index: 2, kind: output, shape index: {}]
  %s3 = sld [smem:[#allocation0]]
  $region49: #{tpu_custom_call.1} parent=0
    _
  %s5 = ssub.s32 1, %s3
  %s6 = scalar_select 0, %s5, %s3
  $region1: #{tpu_custom_call.1} parent=0
    #allocation2 [shape = 'u8[8192]{0}', space=vmem, size = 0x2000, scoped, tag = 'input window, operand 0']
    #allocation3 [shape = 's32[2]{0}', space=sflag, size = 0x8, scoped, tag = 'scoped memory for tpu_custom_call.1']
    #allocation4 [shape = 's32[2]{0}', space=sflag, size = 0x8, scoped, tag = 'scoped memory for tpu_custom_call.1']
    #allocation5 [shape = 'u8[4096]{0}', space=vmem, size = 0x1000, scoped, tag = 'input window, operand 1, single buffered']
    #allocation6 [shape = 's32[1]{0}', space=sflag, size = 0x4, scoped, tag = 'scoped memory for tpu_custom_call.1']
    #allocation7 [shape = 'u8[8192]{0}', space=vmem, size = 0x2000, scoped, tag = 'output window, operand 0']
    %7 = vsyncpa [#allocation3], 0
    %s8 = scalar_lea.sflag [#allocation3], 1
    %9 = vsyncpa %s8, 0
    %10 = vsyncpa [#allocation6], 0
    %11 = vsyncpa [#allocation4], 0
    %s12 = scalar_lea.sflag [#allocation4], 1
    %13 = vsyncpa %s12, 0
    loop: start=0, step=1, limit=4
    $region2: #{tpu_custom_call.1} parent=1 // loop_pre_header
      _
    $region3: #{tpu_custom_call.1} parent=1 // loop_header
      %s15 = sphi 0, %s19
      %p16 = scmp.ge.s32.totalorder %s15, 4
      %s25 = sphi 0, %s27
      %s28 = sphi 0, %s25
      %s29 = sphi 0, %s28
      %s45 = sphi 0, %s29
      %s49 = sphi 0, %s49
      %s51 = sphi 0, %s49
      %s52 = sphi 0, %s51
      %s66 = sphi 0, %s52
      %s72 = sphi 0, %s74
      %s75 = sphi 0, %s72
      %s76 = sphi 0, %s75
      %s92 = sphi 0, %s76
    $region4: #{tpu_custom_call.1} parent=1 // loop_header_branch
      %18 = sbr.rel (%p16) target = $region8
    $region5: #{tpu_custom_call.1} parent=1 // loop_body
      %s20 = ssub.s32 %s15, 1
      %s21 = ssub.s32 %s15, 2
      %s22 = sadd.s32 %s15, 1
      %s23 = ssub.s32 %s15, %s22
      %p24 = scmp.eq.s32.totalorder %s23, 0
      %s26 = sadd.s32 %s25, 1
      %s27 = scalar_select %p24, %s25, %s26
      %p30 = pneg %p24
      %p31 = scmp.eq.s32.totalorder %s15, 1
      %p32 = por %p30, %p31
      %p33 = scmp.ne.s32.totalorder %s25, %s28
      %p34 = scmp.eq.s32.totalorder %s15, 0
      %p35 = por %p33, %p34
      %p36 = scmp.ne.s32.totalorder %s25, %s28
      %p37 = scmp.eq.s32.totalorder %s20, 1
      %p38 = por %p36, %p37
      %p39 = scmp.ne.s32.totalorder %s28, %s29
      %p40 = scmp.eq.s32.totalorder %s20, 0
      %p41 = por %p39, %p40
      %p42 = scmp.ne.s32.totalorder %s28, %s29
      %p43 = scmp.eq.s32.totalorder %s21, 1
      %p44 = por %p42, %p43
      %p46 = scmp.ne.s32.totalorder %s29, %s45
      %p47 = scmp.eq.s32.totalorder %s21, 0
      %p48 = por %p46, %p47
      %s50 = sadd.s32 %s49, 1
      %p53 = scmp.eq.s32.totalorder %s15, 1
      %p54 = scmp.ne.s32.totalorder %s49, %s51
      %p55 = scmp.eq.s32.totalorder %s15, 0
      %p56 = por %p54, %p55
      %p57 = scmp.ne.s32.totalorder %s49, %s51
      %p58 = scmp.eq.s32.totalorder %s20, 1
      %p59 = por %p57, %p58
      %p60 = scmp.ne.s32.totalorder %s51, %s52
      %p61 = scmp.eq.s32.totalorder %s20, 0
      %p62 = por %p60, %p61
      %p63 = scmp.ne.s32.totalorder %s51, %s52
      %p64 = scmp.eq.s32.totalorder %s21, 1
      %p65 = por %p63, %p64
      %p67 = scmp.ne.s32.totalorder %s52, %s66
      %p68 = scmp.eq.s32.totalorder %s21, 0
      %p69 = por %p67, %p68
      %s70 = ssub.s32 %s15, %s22
      %p71 = scmp.eq.s32.totalorder %s70, 0
      %s73 = sadd.s32 %s72, 1
      %s74 = scalar_select %p71, %s72, %s73
      %p77 = pneg %p71
      %p78 = scmp.eq.s32.totalorder %s15, 1
      %p79 = por %p77, %p78
      %p80 = scmp.ne.s32.totalorder %s72, %s75
      %p81 = scmp.eq.s32.totalorder %s15, 0
      %p82 = por %p80, %p81
      %p83 = scmp.ne.s32.totalorder %s72, %s75
      %p84 = scmp.eq.s32.totalorder %s20, 1
      %p85 = por %p83, %p84
      %p86 = scmp.ne.s32.totalorder %s75, %s76
      %p87 = scmp.eq.s32.totalorder %s20, 0
      %p88 = por %p86, %p87
      %p89 = scmp.ne.s32.totalorder %s75, %s76
      %p90 = scmp.eq.s32.totalorder %s21, 1
      %p91 = por %p89, %p90
      %p93 = scmp.ne.s32.totalorder %s76, %s92
      %p94 = scmp.eq.s32.totalorder %s21, 0
      %p95 = por %p93, %p94
      %p96 = scmp.le.s32.totalorder 1, %s15
      %p97 = scmp.lt.s32.totalorder %s15, 3
      %p98 = pnand %p96, %p97
      %p99 = pneg %p98
      // Predicated region
      $region9: #{tpu_custom_call.1} parent=5 // pred_check
        _
      $region10: #{tpu_custom_call.1} parent=5 // pred_check_branch
        %101 = sbr.rel (%p98) target = $region12
      $region11: #{tpu_custom_call.1} parent=5 // pred_region
        %s102 = ssub.s32 %s15, 1
        // Predicated region
        $region13: #{tpu_custom_call.1} parent=11 // pred_check
          %p103 = pneg %p62
        $region14: #{tpu_custom_call.1} parent=11 // pred_check_branch
          %105 = sbr.rel (%p103) target = $region16
        $region15: #{tpu_custom_call.1} parent=11 // pred_region
          %107 = vsyncadd [#allocation6], 0
          %s109 = sshll.u32 %s1, 4
          %s110 = int_to_ptr.hbm [resolvable:$true] %s109
          %s111 = sshll.u32 [#allocation5], 4
          %s112 = int_to_ptr.vmem [resolvable:$true] %s111
          %114 = dma.hbm_to_vmem [thread:$0]  %s110, 128, %s112, [#allocation6]
        $region16: #{tpu_custom_call.1} parent=11 // pred_fallthru
          _
      $region12: #{tpu_custom_call.1} parent=5 // pred_fallthru
        _
      %p115 = scmp.lt.s32.totalorder %s15, 2
      // Predicated region
      $region17: #{tpu_custom_call.1} parent=5 // pred_check
        %p116 = pneg %p115
      $region18: #{tpu_custom_call.1} parent=5 // pred_check_branch
        %118 = sbr.rel (%p116) target = $region20
      $region19: #{tpu_custom_call.1} parent=5 // pred_region
        // Predicated region
        $region21: #{tpu_custom_call.1} parent=19 // pred_check
          %p119 = pneg %p35
        $region22: #{tpu_custom_call.1} parent=19 // pred_check_branch
          %121 = sbr.rel (%p119) target = $region24
        $region23: #{tpu_custom_call.1} parent=19 // pred_region
          %s122 = sand.u32 %s25, 1
          %s123 = scalar_lea.sflag [#allocation3], %s122
          %s124 = sand.u32 %s25, 1
          %s125 = smul.addr %s124, 8
          %s126 = scalar_lea.vmem [#allocation2], %s125
          %128 = vsyncadd %s123, 0
          %s129 = smul.addr %s15, 8
          %s130 = scalar_lea.hbm %s0, %s129
          %s132 = sshll.u32 %s130, 4
          %s133 = int_to_ptr.hbm [resolvable:$true] %s132
          %s134 = sshll.u32 %s126, 4
          %s135 = int_to_ptr.vmem [resolvable:$true] %s134
          %137 = dma.hbm_to_vmem [thread:$0]  %s133, 128, %s135, %s123
        $region24: #{tpu_custom_call.1} parent=19 // pred_fallthru
          _
      $region20: #{tpu_custom_call.1} parent=5 // pred_fallthru
        _
      %p138 = scmp.le.s32.totalorder 1, %s15
      %p139 = scmp.lt.s32.totalorder %s15, 3
      %p140 = pnand %p138, %p139
      %p141 = pneg %p140
      // Predicated region
      $region25: #{tpu_custom_call.1} parent=5 // pred_check
        _
      $region26: #{tpu_custom_call.1} parent=5 // pred_check_branch
        %143 = sbr.rel (%p140) target = $region28
      $region27: #{tpu_custom_call.1} parent=5 // pred_region
        %s144 = ssub.s32 %s15, 1
        %s145 = sand.u32 %s28, 1
        %s146 = scalar_lea.sflag [#allocation3], %s145
        %s147 = sand.u32 %s28, 1
        %s148 = smul.addr %s147, 8
        %s149 = scalar_lea.vmem [#allocation2], %s148
        // Predicated region
        $region29: #{tpu_custom_call.1} parent=27 // pred_check
          %p150 = pneg %p41
        $region30: #{tpu_custom_call.1} parent=27 // pred_check_branch
          %152 = sbr.rel (%p150) target = $region32
        $region31: #{tpu_custom_call.1} parent=27 // pred_region
          %154 = dma.done %s146, 128
        $region32: #{tpu_custom_call.1} parent=27 // pred_fallthru
          _
        // Predicated region
        $region33: #{tpu_custom_call.1} parent=27 // pred_check
          %p155 = pneg %p62
        $region34: #{tpu_custom_call.1} parent=27 // pred_check_branch
          %157 = sbr.rel (%p155) target = $region36
        $region35: #{tpu_custom_call.1} parent=27 // pred_region
          %159 = dma.done [#allocation6], 128
        $region36: #{tpu_custom_call.1} parent=27 // pred_fallthru
          _
        %s160 = sand.u32 %s28, 1
        %s161 = scalar_lea.sflag [#allocation3], %s160
        %s162 = sand.u32 %s28, 1
        %s163 = smul.addr %s162, 8
        %s164 = scalar_lea.vmem [#allocation2], %s163
        %p165 = pneg %p41
        %p166 = pneg %p38
        %p167 = pneg %p62
        %p168 = pneg %p59
        %p169 = pneg %p88
        %p170 = pneg %p85
        %s171 = sand.u32 %s75, 1
        %s172 = scalar_lea.sflag [#allocation4], %s171
        %s173 = sand.u32 %s75, 1
        %s174 = smul.addr %s173, 8
        %s175 = scalar_lea.vmem [#allocation7], %s174
        %v176 = vld [vmem:[%s149] sm:$0xff]
        %v177 = vld [vmem:[#allocation5] sm:$0xff]
        %v178 = vadd.f32 %v176, %v177
        %179 = vst [vmem:[%s175] sm:$0xff] %v178
        %s180 = sand.u32 %s75, 1
        %s181 = scalar_lea.sflag [#allocation4], %s180
        %s182 = sand.u32 %s75, 1
        %s183 = smul.addr %s182, 8
        %s184 = scalar_lea.vmem [#allocation7], %s183
        // Predicated region
        $region37: #{tpu_custom_call.1} parent=27 // pred_check
          %p185 = pneg %p85
        $region38: #{tpu_custom_call.1} parent=27 // pred_check_branch
          %187 = sbr.rel (%p185) target = $region40
        $region39: #{tpu_custom_call.1} parent=27 // pred_region
          %189 = vsyncadd %s181, 0
          %s190 = smul.addr %s20, 8
          %s191 = scalar_lea.hbm %s2, %s190
          %s193 = sshll.u32 %s184, 4
          %s194 = int_to_ptr.vmem [resolvable:$true] %s193
          %s195 = sshll.u32 %s191, 4
          %s196 = int_to_ptr.hbm [resolvable:$true] %s195
          %198 = dma.vmem_to_hbm [thread:$0]  %s194, 128, %s196, %s181
        $region40: #{tpu_custom_call.1} parent=27 // pred_fallthru
          _
      $region28: #{tpu_custom_call.1} parent=5 // pred_fallthru
        _
      %p199 = scmp.le.s32.totalorder 2, %s15
      // Predicated region
      $region41: #{tpu_custom_call.1} parent=5 // pred_check
        %p200 = pneg %p199
      $region42: #{tpu_custom_call.1} parent=5 // pred_check_branch
        %202 = sbr.rel (%p200) target = $region44
      $region43: #{tpu_custom_call.1} parent=5 // pred_region
        %s203 = ssub.s32 %s15, 2
        // Predicated region
        $region45: #{tpu_custom_call.1} parent=43 // pred_check
          %p204 = pneg %p91
        $region46: #{tpu_custom_call.1} parent=43 // pred_check_branch
          %206 = sbr.rel (%p204) target = $region48
        $region47: #{tpu_custom_call.1} parent=43 // pred_region
          %s207 = sand.u32 %s76, 1
          %s208 = scalar_lea.sflag [#allocation4], %s207
          %s209 = sand.u32 %s76, 1
          %s210 = smul.addr %s209, 8
          %s211 = scalar_lea.vmem [#allocation7], %s210
          %213 = dma.done %s208, 128
        $region48: #{tpu_custom_call.1} parent=43 // pred_fallthru
          _
      $region44: #{tpu_custom_call.1} parent=5 // pred_fallthru
        _
    $region6: #{tpu_custom_call.1} parent=1 // loop_footer
      %s19 = sadd.s32 1, %s15
    $region7: #{tpu_custom_call.1} parent=1 // loop_footer_branch
      %14 = sbr.rel target = $region3
    $region8: #{tpu_custom_call.1} parent=1 // loop_exit
      _
    %214 = vsyncpa [#allocation3], 1
    %s215 = scalar_lea.sflag [#allocation3], 1
    %216 = vsyncpa %s215, 1
    %217 = vsyncpa [#allocation6], 1
    %218 = vsyncpa [#allocation4], 1
    %s219 = scalar_lea.sflag [#allocation4], 1
    %220 = vsyncpa %s219, 1

// kernel: tpu_custom_call.1
$region0: #{tpu_custom_call.1}
  #allocation0 [shape = 'u32[]', space=smem, size = 0x4, offset = 0x4, fixed_abs, tag = 'smem constant byte address 0x4 - core index']
  #allocation1 [shape = 'u32[72,128]{1,0:T(1,128)}', space=vmem, size = 0x9000, scoped, tag = 'internal scratch']
  #allocation2 [shape = 'f32[1,96]{1,0:T(1,128)}', space=vmem, size = 0x200, scoped, tag = 'scratch operand']
  #allocation3 [shape = 'f32[1,96]{1,0:T(1,128)}', space=vmem, size = 0x200, scoped, tag = 'scratch operand']
  %s0 = inlined_call_operand.vmem [shape: bf16[2,304,64], index: 0, kind: input, shape index: {}]
  %s1 = inlined_call_operand.vmem [shape: bf16[64,96], index: 1, kind: input, shape index: {}]
  %s2 = inlined_call_operand.vmem [shape: f32[1,96], index: 2, kind: input, shape index: {}]
  %s3 = inlined_call_operand.vmem [shape: f32[1,96], index: 3, kind: input, shape index: {}]
  %s4 = inlined_call_operand.vmem [shape: f32[1,96], index: 4, kind: input, shape index: {}]
  %s5 = inlined_call_operand.vmem [shape: f32[2,304,96], index: 5, kind: output, shape index: {}]
  %s6 = sld [smem:[#allocation0]]
  $region53: #{tpu_custom_call.1} parent=0
    _
  %s8 = ssub.s32 1, %s6
  %s9 = scalar_select 0, %s8, %s6
  loop: start=0, step=1, limit=4
  $region2: #{tpu_custom_call.1} parent=0 // loop_pre_header
    _
  $region3: #{tpu_custom_call.1} parent=0 // loop_header
    %s11 = sphi 0, %s15
    %p12 = scmp.ge.s32.totalorder %s11, 4
    %s18 = sphi 0, %s37
    %s19 = sphi 0, %s33
    %s20 = sphi 0, %s29
    %s21 = sphi 0, %s18
    %s22 = sphi 0, %s19
    %s23 = sphi 0, %s20
    %s24 = sphi 0, %s21
    %s25 = sphi 0, %s22
    %s26 = sphi 0, %s23
    %s42 = sphi 0, %s44
    %s45 = sphi 0, %s42
    %s46 = sphi 0, %s45
    %s62 = sphi 0, %s46
    %s66 = sphi 0, %s66
    %s68 = sphi 0, %s66
    %s69 = sphi 0, %s68
    %s83 = sphi 0, %s69
    %s87 = sphi 0, %s87
    %s89 = sphi 0, %s87
    %s90 = sphi 0, %s89
    %s104 = sphi 0, %s90
    %s108 = sphi 0, %s108
    %s110 = sphi 0, %s108
    %s111 = sphi 0, %s110
    %s125 = sphi 0, %s111
    %s129 = sphi 0, %s129
    %s131 = sphi 0, %s129
    %s132 = sphi 0, %s131
    %s146 = sphi 0, %s132
    %s156 = sphi 0, %s158
    %s159 = sphi 0, %s156
    %s160 = sphi 0, %s159
    %s176 = sphi 0, %s160
  $region4: #{tpu_custom_call.1} parent=0 // loop_header_branch
    %14 = sbr.rel (%p12) target = $region8
  $region5: #{tpu_custom_call.1} parent=0 // loop_body
    %s16 = ssub.s32 %s11, 1
    %s17 = ssub.s32 %s11, 2
    %s27 = sadd.s32 1, %s20
    %p28 = scmp.ge.s32.totalorder %s27, 1
    %s29 = scalar_select %p28, 0, %s27
    %s30 = sadd.s32 1, %s19
    %s31 = scalar_select %p28, %s30, %s19
    %p32 = scmp.ge.s32.totalorder %s31, 1
    %s33 = scalar_select %p32, 0, %s31
    %s34 = sadd.s32 1, %s18
    %s35 = scalar_select %p32, %s34, %s18
    %p36 = scmp.ge.s32.totalorder %s35, 2
    %s37 = scalar_select %p36, 0, %s35
    %s38 = ssub.s32 %s18, %s37
    %s39 = ssub.s32 %s20, %s29
    %s40 = sor.u32 %s38, %s39
    %p41 = scmp.eq.s32.totalorder %s40, 0
    %s43 = sadd.s32 %s42, 1
    %s44 = scalar_select %p41, %s42, %s43
    %p47 = pneg %p41
    %p48 = scmp.eq.s32.totalorder %s11, 1
    %p49 = por %p47, %p48
    %p50 = scmp.ne.s32.totalorder %s42, %s45
    %p51 = scmp.eq.s32.totalorder %s11, 0
    %p52 = por %p50, %p51
    %p53 = scmp.ne.s32.totalorder %s42, %s45
    %p54 = scmp.eq.s32.totalorder %s16, 1
    %p55 = por %p53, %p54
    %p56 = scmp.ne.s32.totalorder %s45, %s46
    %p57 = scmp.eq.s32.totalorder %s16, 0
    %p58 = por %p56, %p57
    %p59 = scmp.ne.s32.totalorder %s45, %s46
    %p60 = scmp.eq.s32.totalorder %s17, 1
    %p61 = por %p59, %p60
    %p63 = scmp.ne.s32.totalorder %s46, %s62
    %p64 = scmp.eq.s32.totalorder %s17, 0
    %p65 = por %p63, %p64
    %s67 = sadd.s32 %s66, 1
    %p70 = scmp.eq.s32.totalorder %s11, 1
    %p71 = scmp.ne.s32.totalorder %s66, %s68
    %p72 = scmp.eq.s32.totalorder %s11, 0
    %p73 = por %p71, %p72
    %p74 = scmp.ne.s32.totalorder %s66, %s68
    %p75 = scmp.eq.s32.totalorder %s16, 1
    %p76 = por %p74, %p75
    %p77 = scmp.ne.s32.totalorder %s68, %s69
    %p78 = scmp.eq.s32.totalorder %s16, 0
    %p79 = por %p77, %p78
    %p80 = scmp.ne.s32.totalorder %s68, %s69
    %p81 = scmp.eq.s32.totalorder %s17, 1
    %p82 = por %p80, %p81
    %p84 = scmp.ne.s32.totalorder %s69, %s83
    %p85 = scmp.eq.s32.totalorder %s17, 0
    %p86 = por %p84, %p85
    %s88 = sadd.s32 %s87, 1
    %p91 = scmp.eq.s32.totalorder %s11, 1
    %p92 = scmp.ne.s32.totalorder %s87, %s89
    %p93 = scmp.eq.s32.totalorder %s11, 0
    %p94 = por %p92, %p93
    %p95 = scmp.ne.s32.totalorder %s87, %s89
    %p96 = scmp.eq.s32.totalorder %s16, 1
    %p97 = por %p95, %p96
    %p98 = scmp.ne.s32.totalorder %s89, %s90
    %p99 = scmp.eq.s32.totalorder %s16, 0
    %p100 = por %p98, %p99
    %p101 = scmp.ne.s32.totalorder %s89, %s90
    %p102 = scmp.eq.s32.totalorder %s17, 1
    %p103 = por %p101, %p102
    %p105 = scmp.ne.s32.totalorder %s90, %s104
    %p106 = scmp.eq.s32.totalorder %s17, 0
    %p107 = por %p105, %p106
    %s109 = sadd.s32 %s108, 1
    %p112 = scmp.eq.s32.totalorder %s11, 1
    %p113 = scmp.ne.s32.totalorder %s108, %s110
    %p114 = scmp.eq.s32.totalorder %s11, 0
    %p115 = por %p113, %p114
    %p116 = scmp.ne.s32.totalorder %s108, %s110
    %p117 = scmp.eq.s32.totalorder %s16, 1
    %p118 = por %p116, %p117
    %p119 = scmp.ne.s32.totalorder %s110, %s111
    %p120 = scmp.eq.s32.totalorder %s16, 0
    %p121 = por %p119, %p120
    %p122 = scmp.ne.s32.totalorder %s110, %s111
    %p123 = scmp.eq.s32.totalorder %s17, 1
    %p124 = por %p122, %p123
    %p126 = scmp.ne.s32.totalorder %s111, %s125
    %p127 = scmp.eq.s32.totalorder %s17, 0
    %p128 = por %p126, %p127
    %s130 = sadd.s32 %s129, 1
    %p133 = scmp.eq.s32.totalorder %s11, 1
    %p134 = scmp.ne.s32.totalorder %s129, %s131
    %p135 = scmp.eq.s32.totalorder %s11, 0
    %p136 = por %p134, %p135
    %p137 = scmp.ne.s32.totalorder %s129, %s131
    %p138 = scmp.eq.s32.totalorder %s16, 1
    %p139 = por %p137, %p138
    %p140 = scmp.ne.s32.totalorder %s131, %s132
    %p141 = scmp.eq.s32.totalorder %s16, 0
    %p142 = por %p140, %p141
    %p143 = scmp.ne.s32.totalorder %s131, %s132
    %p144 = scmp.eq.s32.totalorder %s17, 1
    %p145 = por %p143, %p144
    %p147 = scmp.ne.s32.totalorder %s132, %s146
    %p148 = scmp.eq.s32.totalorder %s17, 0
    %p149 = por %p147, %p148
    %s150 = smul.u32 %s19, %s20
    %s151 = smul.u32 %s33, %s29
    %s152 = ssub.s32 %s18, %s37
    %s153 = ssub.s32 %s150, %s151
    %s154 = sor.u32 %s152, %s153
    %p155 = scmp.eq.s32.totalorder %s154, 0
    %s157 = sadd.s32 %s156, 1
    %s158 = scalar_select %p155, %s156, %s157
    %p161 = pneg %p155
    %p162 = scmp.eq.s32.totalorder %s11, 1
    %p163 = por %p161, %p162
    %p164 = scmp.ne.s32.totalorder %s156, %s159
    %p165 = scmp.eq.s32.totalorder %s11, 0
    %p166 = por %p164, %p165
    %p167 = scmp.ne.s32.totalorder %s156, %s159
    %p168 = scmp.eq.s32.totalorder %s16, 1
    %p169 = por %p167, %p168
    %p170 = scmp.ne.s32.totalorder %s159, %s160
    %p171 = scmp.eq.s32.totalorder %s16, 0
    %p172 = por %p170, %p171
    %p173 = scmp.ne.s32.totalorder %s159, %s160
    %p174 = scmp.eq.s32.totalorder %s17, 1
    %p175 = por %p173, %p174
    %p177 = scmp.ne.s32.totalorder %s160, %s176
    %p178 = scmp.eq.s32.totalorder %s17, 0
    %p179 = por %p177, %p178
    %p180 = scmp.le.s32.totalorder 1, %s11
    %p181 = scmp.lt.s32.totalorder %s11, 3
    %p182 = pnand %p180, %p181
    %p183 = pneg %p182
    // Predicated region
    $region9: #{tpu_custom_call.1} parent=5 // pred_check
      _
    $region10: #{tpu_custom_call.1} parent=5 // pred_check_branch
      %185 = sbr.rel (%p182) target = $region12
    $region11: #{tpu_custom_call.1} parent=5 // pred_region
      %s186 = ssub.s32 %s11, 1
      // Predicated region
      $region13: #{tpu_custom_call.1} parent=11 // pred_check
        %p187 = pneg %p79
      $region14: #{tpu_custom_call.1} parent=11 // pred_check_branch
        %189 = sbr.rel (%p187) target = $region16
      $region15: #{tpu_custom_call.1} parent=11 // pred_region
        _
      $region16: #{tpu_custom_call.1} parent=11 // pred_fallthru
        _
      // Predicated region
      $region17: #{tpu_custom_call.1} parent=11 // pred_check
        %p190 = pneg %p100
      $region18: #{tpu_custom_call.1} parent=11 // pred_check_branch
        %192 = sbr.rel (%p190) target = $region20
      $region19: #{tpu_custom_call.1} parent=11 // pred_region
        _
      $region20: #{tpu_custom_call.1} parent=11 // pred_fallthru
        _
      // Predicated region
      $region21: #{tpu_custom_call.1} parent=11 // pred_check
        %p193 = pneg %p121
      $region22: #{tpu_custom_call.1} parent=11 // pred_check_branch
        %195 = sbr.rel (%p193) target = $region24
      $region23: #{tpu_custom_call.1} parent=11 // pred_region
        _
      $region24: #{tpu_custom_call.1} parent=11 // pred_fallthru
        _
      // Predicated region
      $region25: #{tpu_custom_call.1} parent=11 // pred_check
        %p196 = pneg %p142
      $region26: #{tpu_custom_call.1} parent=11 // pred_check_branch
        %198 = sbr.rel (%p196) target = $region28
      $region27: #{tpu_custom_call.1} parent=11 // pred_region
        _
      $region28: #{tpu_custom_call.1} parent=11 // pred_fallthru
        _
    $region12: #{tpu_custom_call.1} parent=5 // pred_fallthru
      _
    %p199 = scmp.lt.s32.totalorder %s11, 2
    // Predicated region
    $region29: #{tpu_custom_call.1} parent=5 // pred_check
      %p200 = pneg %p199
    $region30: #{tpu_custom_call.1} parent=5 // pred_check_branch
      %202 = sbr.rel (%p200) target = $region32
    $region31: #{tpu_custom_call.1} parent=5 // pred_region
      // Predicated region
      $region33: #{tpu_custom_call.1} parent=31 // pred_check
        %p203 = pneg %p52
      $region34: #{tpu_custom_call.1} parent=31 // pred_check_branch
        %205 = sbr.rel (%p203) target = $region36
      $region35: #{tpu_custom_call.1} parent=31 // pred_region
        %s206 = smul.u32 38, %s20
        %p207 = scmp.lt.s32.totalorder %s18, 1
        %s208 = scalar_select %p207, %s18, 1
        %p209 = scmp.lt.s32.totalorder %s206, 37
        %s210 = scalar_select %p209, %s206, 37
        %s211 = smul.addr %s208, 38
        %s212 = sadd.s32 %s210, %s211
        %s213 = smul.addr %s212, 4
        %s214 = scalar_lea.vmem %s0, %s213
        %s215 = smul.u32 38, %s20
      $region36: #{tpu_custom_call.1} parent=31 // pred_fallthru
        _
    $region32: #{tpu_custom_call.1} parent=5 // pred_fallthru
      _
    %p216 = scmp.le.s32.totalorder 1, %s11
    %p217 = scmp.lt.s32.totalorder %s11, 3
    %p218 = pnand %p216, %p217
    %p219 = pneg %p218
    // Predicated region
    $region37: #{tpu_custom_call.1} parent=5 // pred_check
      _
    $region38: #{tpu_custom_call.1} parent=5 // pred_check_branch
      %221 = sbr.rel (%p218) target = $region40
    $region39: #{tpu_custom_call.1} parent=5 // pred_region
      %s222 = ssub.s32 %s11, 1
      %s223 = smul.u32 38, %s23
      %p224 = scmp.lt.s32.totalorder %s21, 1
      %s225 = scalar_select %p224, %s21, 1
      %p226 = scmp.lt.s32.totalorder %s223, 37
      %s227 = scalar_select %p226, %s223, 37
      %s228 = smul.addr %s225, 38
      %s229 = sadd.s32 %s227, %s228
      %s230 = smul.addr %s229, 4
      %s231 = scalar_lea.vmem %s0, %s230
      %p232 = pneg %p58
      %p233 = pneg %p55
      %p234 = pneg %p79
      %p235 = pneg %p76
      %p236 = pneg %p100
      %p237 = pneg %p97
      %p238 = pneg %p121
      %p239 = pneg %p118
      %p240 = pneg %p142
      %p241 = pneg %p139
      %p242 = pneg %p172
      %p243 = pneg %p169
      %s244 = smul.u32 %s22, %s23
      %s245 = smul.u32 38, %s244
      %p246 = scmp.lt.s32.totalorder %s21, 1
      %s247 = scalar_select %p246, %s21, 1
      %p248 = scmp.lt.s32.totalorder %s245, 37
      %s249 = scalar_select %p248, %s245, 37
      %s250 = smul.addr %s247, 38
      %s251 = sadd.s32 %s249, %s250
      %s252 = smul.addr %s251, 8
      %s253 = scalar_lea.vmem %s5, %s252
      %s254 = smul.u32 38, %s23
      %p255 = scmp.lt.s32.totalorder %s21, 1
      %s256 = scalar_select %p255, %s21, 1
      %p257 = scmp.lt.s32.totalorder %s254, 37
      %s258 = scalar_select %p257, %s254, 37
      %s259 = smul.addr %s256, 38
      %s260 = sadd.s32 %s258, %s259
      %s261 = smul.addr %s260, 4
      %s262 = scalar_lea.vmem %s0, %s261
      %s263 = smul.u32 38, %s23
      %s264 = smul.u32 %s22, %s23
      %s265 = smul.u32 38, %s264
      %p266 = scmp.lt.s32.totalorder %s21, 1
      %s267 = scalar_select %p266, %s21, 1
      %p268 = scmp.lt.s32.totalorder %s265, 37
      %s269 = scalar_select %p268, %s265, 37
      %s270 = smul.addr %s267, 38
      %s271 = sadd.s32 %s269, %s270
      %s272 = smul.addr %s271, 8
      %s273 = scalar_lea.vmem %s5, %s272
      %s274 = smul.u32 %s22, %s23
      %s275 = smul.u32 38, %s274
      %v277 = vld [vmem:[%s262] sm:$0xf]
      %v278 = vld [vmem:[%s262 + $0x4] sm:$0xf]
      %v279 = vld [vmem:[%s262 + $0x8] sm:$0xf]
      %v280 = vld [vmem:[%s262 + $0xc] sm:$0xf]
      %v281 = vld [vmem:[%s262 + $0x10] sm:$0xf]
      %v282 = vld [vmem:[%s262 + $0x14] sm:$0xf]
      %v283 = vld [vmem:[%s262 + $0x18] sm:$0xf]
      %v284 = vld [vmem:[%s262 + $0x1c] sm:$0xf]
      %v285 = vld [vmem:[%s262 + $0x20] sm:$0xf]
      %v286 = vld [vmem:[%s262 + $0x24] sm:$0xf]
      %v287 = vld [vmem:[%s262 + $0x28] sm:$0xf]
      %v288 = vld [vmem:[%s262 + $0x2c] sm:$0xf]
      %v289 = vld [vmem:[%s262 + $0x30] sm:$0xf]
      %v290 = vld [vmem:[%s262 + $0x34] sm:$0xf]
      %v291 = vld [vmem:[%s262 + $0x38] sm:$0xf]
      %v292 = vld [vmem:[%s262 + $0x3c] sm:$0xf]
      %v293 = vld [vmem:[%s262 + $0x40] sm:$0xf]
      %v294 = vld [vmem:[%s262 + $0x44] sm:$0xf]
      %v295 = vld [vmem:[%s262 + $0x48] sm:$0xf]
      %v296 = vld [vmem:[%s262 + $0x4c] sm:$0xf]
      %v297 = vld [vmem:[%s262 + $0x50] sm:$0xf]
      %v298 = vld [vmem:[%s262 + $0x54] sm:$0xf]
      %v299 = vld [vmem:[%s262 + $0x58] sm:$0xf]
      %v300 = vld [vmem:[%s262 + $0x5c] sm:$0xf]
      %v301 = vld [vmem:[%s262 + $0x60] sm:$0xf]
      %v302 = vld [vmem:[%s262 + $0x64] sm:$0xf]
      %v303 = vld [vmem:[%s262 + $0x68] sm:$0xf]
      %v304 = vld [vmem:[%s262 + $0x6c] sm:$0xf]
      %v305 = vld [vmem:[%s262 + $0x70] sm:$0xf]
      %v306 = vld [vmem:[%s262 + $0x74] sm:$0xf]
      %v307 = vld [vmem:[%s262 + $0x78] sm:$0xf]
      %v308 = vld [vmem:[%s262 + $0x7c] sm:$0xf]
      %v309 = vld [vmem:[%s262 + $0x80] sm:$0xf]
      %v310 = vld [vmem:[%s262 + $0x84] sm:$0xf]
      %v311 = vld [vmem:[%s262 + $0x88] sm:$0xf]
      %v312 = vld [vmem:[%s262 + $0x8c] sm:$0xf]
      %v313 = vld [vmem:[%s262 + $0x90] sm:$0xf]
      %v314 = vld [vmem:[%s262 + $0x94] sm:$0xf]
      %v315 = vld [vmem:[%s1] sm:$0xf]
      %v316 = vld [vmem:[%s1 + $0x4] sm:$0xf]
      %v317 = vld [vmem:[%s1 + $0x8] sm:$0xf]
      %v318 = vld [vmem:[%s1 + $0xc] sm:$0xf]
      %v319 = vld [vmem:[%s1 + $0x10] sm:$0xf]
      %v320 = vld [vmem:[%s1 + $0x14] sm:$0xf]
      %v321 = vld [vmem:[%s1 + $0x18] sm:$0xf]
      %v322 = vld [vmem:[%s1 + $0x1c] sm:$0xf]
      %v323 = vld [vmem:[%s2] sm:$0x1]
      %v325 = vperm.slane %v323, 0
      %v365 = vunpack.c.l.b16 %v277
      %v366 = vunpack.c.l.b16 %v278
      %v367 = vunpack.c.l.b16 %v279
      %v368 = vunpack.c.l.b16 %v280
      %v369 = vunpack.c.l.b16 %v281
      %v370 = vunpack.c.l.b16 %v282
      %v371 = vunpack.c.l.b16 %v283
      %v372 = vunpack.c.l.b16 %v284
      %v373 = vunpack.c.l.b16 %v285
      %v374 = vunpack.c.l.b16 %v286
      %v375 = vunpack.c.l.b16 %v287
      %v376 = vunpack.c.l.b16 %v288
      %v377 = vunpack.c.l.b16 %v289
      %v378 = vunpack.c.l.b16 %v290
      %v379 = vunpack.c.l.b16 %v291
      %v380 = vunpack.c.l.b16 %v292
      %v381 = vunpack.c.l.b16 %v293
      %v382 = vunpack.c.l.b16 %v294
      %v383 = vunpack.c.l.b16 %v295
      %v384 = vunpack.c.l.b16 %v296
      %v385 = vunpack.c.l.b16 %v297
      %v386 = vunpack.c.l.b16 %v298
      %v387 = vunpack.c.l.b16 %v299
      %v388 = vunpack.c.l.b16 %v300
      %v389 = vunpack.c.l.b16 %v301
      %v390 = vunpack.c.l.b16 %v302
      %v391 = vunpack.c.l.b16 %v303
      %v392 = vunpack.c.l.b16 %v304
      %v393 = vunpack.c.l.b16 %v305
      %v394 = vunpack.c.l.b16 %v306
      %v395 = vunpack.c.l.b16 %v307
      %v396 = vunpack.c.l.b16 %v308
      %v397 = vunpack.c.l.b16 %v309
      %v398 = vunpack.c.l.b16 %v310
      %v399 = vunpack.c.l.b16 %v311
      %v400 = vunpack.c.l.b16 %v312
      %v401 = vunpack.c.l.b16 %v313
      %v402 = vunpack.c.l.b16 %v314
      %v403 = vpack.c.b16 %v366, %v365
      %v404 = vpack.c.b16 %v368, %v367
      %v405 = vpack.c.b16 %v370, %v369
      %v406 = vpack.c.b16 %v372, %v371
      %v407 = vpack.c.b16 %v374, %v373
      %v408 = vpack.c.b16 %v376, %v375
      %v409 = vpack.c.b16 %v378, %v377
      %v410 = vpack.c.b16 %v380, %v379
      %v411 = vpack.c.b16 %v382, %v381
      %v412 = vpack.c.b16 %v384, %v383
      %v413 = vpack.c.b16 %v386, %v385
      %v414 = vpack.c.b16 %v388, %v387
      %v415 = vpack.c.b16 %v390, %v389
      %v416 = vpack.c.b16 %v392, %v391
      %v417 = vpack.c.b16 %v394, %v393
      %v418 = vpack.c.b16 %v396, %v395
      %v419 = vpack.c.b16 %v398, %v397
      %v420 = vpack.c.b16 %v400, %v399
      %v421 = vpack.c.b16 %v402, %v401
      %v430 = vunpack.c.l.b16 %v315
      %v431 = vunpack.c.l.b16 %v316
      %v432 = vunpack.c.l.b16 %v317
      %v433 = vunpack.c.l.b16 %v318
      %v434 = vunpack.c.l.b16 %v319
      %v435 = vunpack.c.l.b16 %v320
      %v436 = vunpack.c.l.b16 %v321
      %v437 = vunpack.c.l.b16 %v322
      %v438 = vpack.c.b16 %v431, %v430
      %v439 = vpack.c.b16 %v433, %v432
      %v440 = vpack.c.b16 %v435, %v434
      %v441 = vpack.c.b16 %v437, %v436
      %vm446 = vcmask 523264
      %v448 = vsel %vm446, %v403, 0
      %v451 = vsel %vm446, %v404, 0
      %v454 = vsel %vm446, %v405, 0
      %v457 = vsel %vm446, %v406, 0
      %v460 = vsel %vm446, %v407, 0
      %v463 = vsel %vm446, %v408, 0
      %v466 = vsel %vm446, %v409, 0
      %v469 = vsel %vm446, %v410, 0
      %v472 = vsel %vm446, %v411, 0
      %v475 = vsel %vm446, %v412, 0
      %v478 = vsel %vm446, %v413, 0
      %v481 = vsel %vm446, %v414, 0
      %v484 = vsel %vm446, %v415, 0
      %v487 = vsel %vm446, %v416, 0
      %v490 = vsel %vm446, %v417, 0
      %v493 = vsel %vm446, %v418, 0
      %v496 = vsel %vm446, %v419, 0
      %v499 = vsel %vm446, %v420, 0
      %v502 = vsel %vm446, %v421, 0
      %504 = vmatpush.bf16.msra.mxu0 0
      %505 = vmatpush.bf16.msra.mxu0 0
      %506 = vmatpush.bf16.msra.mxu0 0
      %507 = vmatpush.bf16.msra.mxu0 0
      %508 = vmatpush.bf16.msra.mxu0 %v441
      %509 = vmatpush.bf16.msra.mxu0 %v440
      %510 = vmatpush.bf16.msra.mxu0 %v439
      %511 = vmatpush.bf16.msra.mxu0 %v438
      %512 = vmatmul.bf16.gmra.mxu0 %v448
      %v513 = vpop.f32.mrf.mxu0
      %v514 = vadd.f32 %v325, %v513
      %v515 = vpop.f32.mrf.mxu0
      %v516 = vadd.f32 %v325, %v515
      %517 = vmatmul.bf16.gmra.mxu0 %v451
      %v518 = vpop.f32.mrf.mxu0
      %v519 = vadd.f32 %v325, %v518
      %v520 = vpop.f32.mrf.mxu0
      %v521 = vadd.f32 %v325, %v520
      %522 = vmatmul.bf16.gmra.mxu0 %v454
      %v523 = vpop.f32.mrf.mxu0
      %v524 = vadd.f32 %v325, %v523
      %v525 = vpop.f32.mrf.mxu0
      %v526 = vadd.f32 %v325, %v525
      %527 = vmatmul.bf16.gmra.mxu0 %v457
      %v528 = vpop.f32.mrf.mxu0
      %v529 = vadd.f32 %v325, %v528
      %v530 = vpop.f32.mrf.mxu0
      %v531 = vadd.f32 %v325, %v530
      %532 = vmatmul.bf16.gmra.mxu0 %v460
      %v533 = vpop.f32.mrf.mxu0
      %v534 = vadd.f32 %v325, %v533
      %v535 = vpop.f32.mrf.mxu0
      %v536 = vadd.f32 %v325, %v535
      %537 = vmatmul.bf16.gmra.mxu0 %v463
      %v538 = vpop.f32.mrf.mxu0
      %v539 = vadd.f32 %v325, %v538
      %v540 = vpop.f32.mrf.mxu0
      %v541 = vadd.f32 %v325, %v540
      %542 = vmatmul.bf16.gmra.mxu0 %v466
      %v543 = vpop.f32.mrf.mxu0
      %v544 = vadd.f32 %v325, %v543
      %v545 = vpop.f32.mrf.mxu0
      %v546 = vadd.f32 %v325, %v545
      %547 = vmatmul.bf16.gmra.mxu0 %v469
      %v548 = vpop.f32.mrf.mxu0
      %v549 = vadd.f32 %v325, %v548
      %v550 = vpop.f32.mrf.mxu0
      %v551 = vadd.f32 %v325, %v550
      %552 = vmatmul.bf16.gmra.mxu0 %v472
      %v553 = vpop.f32.mrf.mxu0
      %v554 = vadd.f32 %v325, %v553
      %v555 = vpop.f32.mrf.mxu0
      %v556 = vadd.f32 %v325, %v555
      %557 = vmatmul.bf16.gmra.mxu0 %v475
      %v558 = vpop.f32.mrf.mxu0
      %v559 = vadd.f32 %v325, %v558
      %v560 = vpop.f32.mrf.mxu0
      %v561 = vadd.f32 %v325, %v560
      %562 = vmatmul.bf16.gmra.mxu0 %v478
      %v563 = vpop.f32.mrf.mxu0
      %v564 = vadd.f32 %v325, %v563
      %v565 = vpop.f32.mrf.mxu0
      %v566 = vadd.f32 %v325, %v565
      %567 = vmatmul.bf16.gmra.mxu0 %v481
      %v568 = vpop.f32.mrf.mxu0
      %v569 = vadd.f32 %v325, %v568
      %v570 = vpop.f32.mrf.mxu0
      %v571 = vadd.f32 %v325, %v570
      %572 = vmatmul.bf16.gmra.mxu0 %v484
      %v573 = vpop.f32.mrf.mxu0
      %v574 = vadd.f32 %v325, %v573
      %v575 = vpop.f32.mrf.mxu0
      %v576 = vadd.f32 %v325, %v575
      %577 = vmatmul.bf16.gmra.mxu0 %v487
      %v578 = vpop.f32.mrf.mxu0
      %v579 = vadd.f32 %v325, %v578
      %v580 = vpop.f32.mrf.mxu0
      %v581 = vadd.f32 %v325, %v580
      %582 = vmatmul.bf16.gmra.mxu0 %v490
      %v583 = vpop.f32.mrf.mxu0
      %v584 = vadd.f32 %v325, %v583
      %v585 = vpop.f32.mrf.mxu0
      %v586 = vadd.f32 %v325, %v585
      %587 = vmatmul.bf16.gmra.mxu0 %v493
      %v588 = vpop.f32.mrf.mxu0
      %v589 = vadd.f32 %v325, %v588
      %v590 = vpop.f32.mrf.mxu0
      %v591 = vadd.f32 %v325, %v590
      %592 = vmatmul.bf16.gmra.mxu0 %v496
      %v593 = vpop.f32.mrf.mxu0
      %v594 = vadd.f32 %v325, %v593
      %v595 = vpop.f32.mrf.mxu0
      %v596 = vadd.f32 %v325, %v595
      %597 = vmatmul.bf16.gmra.mxu0 %v499
      %v598 = vpop.f32.mrf.mxu0
      %v599 = vadd.f32 %v325, %v598
      %v600 = vpop.f32.mrf.mxu0
      %v601 = vadd.f32 %v325, %v600
      %602 = vmatmul.bf16.gmra.mxu0 %v502
      %v603 = vpop.f32.mrf.mxu0
      %v604 = vadd.f32 %v325, %v603
      %v605 = vpop.f32.mrf.mxu0
      %v606 = vadd.f32 %v325, %v605
      %607 = vdwg.mxu0
      %vm608 = vcmask 785408
      %v609 = vsel %vm608, %v514, 0.0
      %v610 = vsel %vm608, %v516, 0.0
      %v611 = vadd.f32 %v609, %v610
      %v612 = vsel %vm608, %v519, 0.0
      %v613 = vadd.f32 %v611, %v612
      %v614 = vsel %vm608, %v521, 0.0
      %v615 = vadd.f32 %v613, %v614
      %v616 = vsel %vm608, %v524, 0.0
      %v617 = vadd.f32 %v615, %v616
      %v618 = vsel %vm608, %v526, 0.0
      %v619 = vadd.f32 %v617, %v618
      %v620 = vsel %vm608, %v529, 0.0
      %v621 = vadd.f32 %v619, %v620
      %v622 = vsel %vm608, %v531, 0.0
      %v623 = vadd.f32 %v621, %v622
      %v624 = vsel %vm608, %v534, 0.0
      %v625 = vadd.f32 %v623, %v624
      %v626 = vsel %vm608, %v536, 0.0
      %v627 = vadd.f32 %v625, %v626
      %v628 = vsel %vm608, %v539, 0.0
      %v629 = vadd.f32 %v627, %v628
      %v630 = vsel %vm608, %v541, 0.0
      %v631 = vadd.f32 %v629, %v630
      %v632 = vsel %vm608, %v544, 0.0
      %v633 = vadd.f32 %v631, %v632
      %v634 = vsel %vm608, %v546, 0.0
      %v635 = vadd.f32 %v633, %v634
      %v636 = vsel %vm608, %v549, 0.0
      %v637 = vadd.f32 %v635, %v636
      %v638 = vsel %vm608, %v551, 0.0
      %v639 = vadd.f32 %v637, %v638
      %v640 = vsel %vm608, %v554, 0.0
      %v641 = vadd.f32 %v639, %v640
      %v642 = vsel %vm608, %v556, 0.0
      %v643 = vadd.f32 %v641, %v642
      %v644 = vsel %vm608, %v559, 0.0
      %v645 = vadd.f32 %v643, %v644
      %v646 = vsel %vm608, %v561, 0.0
      %v647 = vadd.f32 %v645, %v646
      %v648 = vsel %vm608, %v564, 0.0
      %v649 = vadd.f32 %v647, %v648
      %v650 = vsel %vm608, %v566, 0.0
      %v651 = vadd.f32 %v649, %v650
      %v652 = vsel %vm608, %v569, 0.0
      %v653 = vadd.f32 %v651, %v652
      %v654 = vsel %vm608, %v571, 0.0
      %v655 = vadd.f32 %v653, %v654
      %v656 = vsel %vm608, %v574, 0.0
      %v657 = vadd.f32 %v655, %v656
      %v658 = vsel %vm608, %v576, 0.0
      %v659 = vadd.f32 %v657, %v658
      %v660 = vsel %vm608, %v579, 0.0
      %v661 = vadd.f32 %v659, %v660
      %v662 = vsel %vm608, %v581, 0.0
      %v663 = vadd.f32 %v661, %v662
      %v664 = vsel %vm608, %v584, 0.0
      %v665 = vadd.f32 %v663, %v664
      %v666 = vsel %vm608, %v586, 0.0
      %v667 = vadd.f32 %v665, %v666
      %v668 = vsel %vm608, %v589, 0.0
      %v669 = vadd.f32 %v667, %v668
      %v670 = vsel %vm608, %v591, 0.0
      %v671 = vadd.f32 %v669, %v670
      %v672 = vsel %vm608, %v594, 0.0
      %v673 = vadd.f32 %v671, %v672
      %v674 = vsel %vm608, %v596, 0.0
      %v675 = vadd.f32 %v673, %v674
      %v676 = vsel %vm608, %v599, 0.0
      %v677 = vadd.f32 %v675, %v676
      %v678 = vsel %vm608, %v601, 0.0
      %v679 = vadd.f32 %v677, %v678
      %v680 = vsel %vm608, %v604, 0.0
      %v681 = vadd.f32 %v679, %v680
      %v682 = vsel %vm608, %v606, 0.0
      %v683 = vadd.f32 %v681, %v682
      %684 = vadd.xlane.f32.xlu0 %v683
      %v685 = vpop.xlane.xlu0 %684
      %v686 = vrot.slane %v685, 4
      %v687 = vadd.f32 %v685, %v686
      %v688 = vrot.slane %v687, 2
      %v689 = vadd.f32 %v687, %v688
      %v690 = vrot.slane %v689, 1
      %v691 = vadd.f32 %v689, %v690
      %s692 = vtos %v691
      %v693 = vmul.f32 %v514, %v514
      %v694 = vmul.f32 %v516, %v516
      %v695 = vmul.f32 %v519, %v519
      %v696 = vmul.f32 %v521, %v521
      %v697 = vmul.f32 %v524, %v524
      %v698 = vmul.f32 %v526, %v526
      %v699 = vmul.f32 %v529, %v529
      %v700 = vmul.f32 %v531, %v531
      %v701 = vmul.f32 %v534, %v534
      %v702 = vmul.f32 %v536, %v536
      %v703 = vmul.f32 %v539, %v539
      %v704 = vmul.f32 %v541, %v541
      %v705 = vmul.f32 %v544, %v544
      %v706 = vmul.f32 %v546, %v546
      %v707 = vmul.f32 %v549, %v549
      %v708 = vmul.f32 %v551, %v551
      %v709 = vmul.f32 %v554, %v554
      %v710 = vmul.f32 %v556, %v556
      %v711 = vmul.f32 %v559, %v559
      %v712 = vmul.f32 %v561, %v561
      %v713 = vmul.f32 %v564, %v564
      %v714 = vmul.f32 %v566, %v566
      %v715 = vmul.f32 %v569, %v569
      %v716 = vmul.f32 %v571, %v571
      %v717 = vmul.f32 %v574, %v574
      %v718 = vmul.f32 %v576, %v576
      %v719 = vmul.f32 %v579, %v579
      %v720 = vmul.f32 %v581, %v581
      %v721 = vmul.f32 %v584, %v584
      %v722 = vmul.f32 %v586, %v586
      %v723 = vmul.f32 %v589, %v589
      %v724 = vmul.f32 %v591, %v591
      %v725 = vmul.f32 %v594, %v594
      %v726 = vmul.f32 %v596, %v596
      %v727 = vmul.f32 %v599, %v599
      %v728 = vmul.f32 %v601, %v601
      %v729 = vmul.f32 %v604, %v604
      %v730 = vmul.f32 %v606, %v606
      %v731 = vsel %vm608, %v693, 0.0
      %v732 = vsel %vm608, %v694, 0.0
      %v733 = vadd.f32 %v731, %v732
      %v734 = vsel %vm608, %v695, 0.0
      %v735 = vadd.f32 %v733, %v734
      %v736 = vsel %vm608, %v696, 0.0
      %v737 = vadd.f32 %v735, %v736
      %v738 = vsel %vm608, %v697, 0.0
      %v739 = vadd.f32 %v737, %v738
      %v740 = vsel %vm608, %v698, 0.0
      %v741 = vadd.f32 %v739, %v740
      %v742 = vsel %vm608, %v699, 0.0
      %v743 = vadd.f32 %v741, %v742
      %v744 = vsel %vm608, %v700, 0.0
      %v745 = vadd.f32 %v743, %v744
      %v746 = vsel %vm608, %v701, 0.0
      %v747 = vadd.f32 %v745, %v746
      %v748 = vsel %vm608, %v702, 0.0
      %v749 = vadd.f32 %v747, %v748
      %v750 = vsel %vm608, %v703, 0.0
      %v751 = vadd.f32 %v749, %v750
      %v752 = vsel %vm608, %v704, 0.0
      %v753 = vadd.f32 %v751, %v752
      %v754 = vsel %vm608, %v705, 0.0
      %v755 = vadd.f32 %v753, %v754
      %v756 = vsel %vm608, %v706, 0.0
      %v757 = vadd.f32 %v755, %v756
      %v758 = vsel %vm608, %v707, 0.0
      %v759 = vadd.f32 %v757, %v758
      %v760 = vsel %vm608, %v708, 0.0
      %v761 = vadd.f32 %v759, %v760
      %v762 = vsel %vm608, %v709, 0.0
      %v763 = vadd.f32 %v761, %v762
      %v764 = vsel %vm608, %v710, 0.0
      %v765 = vadd.f32 %v763, %v764
      %v766 = vsel %vm608, %v711, 0.0
      %v767 = vadd.f32 %v765, %v766
      %v768 = vsel %vm608, %v712, 0.0
      %v769 = vadd.f32 %v767, %v768
      %v770 = vsel %vm608, %v713, 0.0
      %v771 = vadd.f32 %v769, %v770
      %v772 = vsel %vm608, %v714, 0.0
      %v773 = vadd.f32 %v771, %v772
      %v774 = vsel %vm608, %v715, 0.0
      %v775 = vadd.f32 %v773, %v774
      %v776 = vsel %vm608, %v716, 0.0
      %v777 = vadd.f32 %v775, %v776
      %v778 = vsel %vm608, %v717, 0.0
      %v779 = vadd.f32 %v777, %v778
      %v780 = vsel %vm608, %v718, 0.0
      %v781 = vadd.f32 %v779, %v780
      %v782 = vsel %vm608, %v719, 0.0
      %v783 = vadd.f32 %v781, %v782
      %v784 = vsel %vm608, %v720, 0.0
      %v785 = vadd.f32 %v783, %v784
      %v786 = vsel %vm608, %v721, 0.0
      %v787 = vadd.f32 %v785, %v786
      %v788 = vsel %vm608, %v722, 0.0
      %v789 = vadd.f32 %v787, %v788
      %v790 = vsel %vm608, %v723, 0.0
      %v791 = vadd.f32 %v789, %v790
      %v792 = vsel %vm608, %v724, 0.0
      %v793 = vadd.f32 %v791, %v792
      %v794 = vsel %vm608, %v725, 0.0
      %v795 = vadd.f32 %v793, %v794
      %v796 = vsel %vm608, %v726, 0.0
      %v797 = vadd.f32 %v795, %v796
      %v798 = vsel %vm608, %v727, 0.0
      %v799 = vadd.f32 %v797, %v798
      %v800 = vsel %vm608, %v728, 0.0
      %v801 = vadd.f32 %v799, %v800
      %v802 = vsel %vm608, %v729, 0.0
      %v803 = vadd.f32 %v801, %v802
      %v804 = vsel %vm608, %v730, 0.0
      %v805 = vadd.f32 %v803, %v804
      %806 = vadd.xlane.f32.xlu0 %v805
      %v807 = vpop.xlane.xlu0 %806
      %v808 = vrot.slane %v807, 4
      %v809 = vadd.f32 %v807, %v808
      %v810 = vrot.slane %v809, 2
      %v811 = vadd.f32 %v809, %v810
      %v812 = vrot.slane %v811, 1
      %v813 = vadd.f32 %v811, %v812
      %s814 = vtos %v813
      %vm815 = vcmask 778240
      %v816 = vsel %vm815, %v323, 0.0
      %817 = vadd.xlane.f32.xlu0 %v816
      %v818 = vpop.xlane.xlu0 %817
      %v819 = vrot.slane %v818, 4
      %v820 = vadd.f32 %v818, %v819
      %v821 = vrot.slane %v820, 2
      %v822 = vadd.f32 %v820, %v821
      %v823 = vrot.slane %v822, 1
      %v824 = vadd.f32 %v822, %v823
      %s825 = vtos %v824
      %s826 = smul.f32 %s825, 4.0
      %s827 = ssub.f32 %s692, %s826
      %v828 = vmul.f32 %v323, %v323
      %v829 = vsel %vm815, %v828, 0.0
      %830 = vadd.xlane.f32.xlu0 %v829
      %v831 = vpop.xlane.xlu0 %830
      %v832 = vrot.slane %v831, 4
      %v833 = vadd.f32 %v831, %v832
      %v834 = vrot.slane %v833, 2
      %v835 = vadd.f32 %v833, %v834
      %v836 = vrot.slane %v835, 1
      %v837 = vadd.f32 %v835, %v836
      %s838 = vtos %v837
      %s839 = smul.f32 %s838, 4.0
      %s840 = ssub.f32 %s814, %s839
      %s841 = smul.f32 %s827, 3.4722223e-05
      %s842 = smul.f32 %s840, 3.4722223e-05
      %s843 = smul.f32 %s841, %s841
      %s844 = ssub.f32 %s842, %s843
      %s845 = smax.f32 %s844, 0.0
      %s846 = sadd.f32 %s845, 1e-05
      %v847 = vstv %s846
      %v848 = vrsqrt.pop %v847
      %v849 = vmul.f32 %v848, %v847
      %v850 = vmul.f32 %v849, %v848
      %v851 = vmul.f32 0.5, %v850
      %v852 = vsub.f32 1.5, %v851
      %v853 = vmul.f32 %v848, %v852
      %vm854 = vweird.f32 %v847
      %vm855 = vweird.f32 %v848
      %vm856 = vmor %vm854, %vm855
      %v857 = vsel %vm856, %v848, %v853
      %s858 = vtos %v857
      %v859 = vld [vmem:[%s3] sm:$0x1]
      %v860 = vstv %s858
      %v861 = vmul.f32 %v860, %v859
      %v862 = vld [vmem:[%s4] sm:$0x1]
      %v863 = vstv %s841
      %v864 = vmul.f32 %v863, %v861
      %v865 = vsub.f32 %v862, %v864
      %v867 = vperm.slane %v861, 0
      %v869 = vmul.f32 %v514, %v867
      %v870 = vmul.f32 %v516, %v867
      %v871 = vmul.f32 %v519, %v867
      %v872 = vmul.f32 %v521, %v867
      %v873 = vmul.f32 %v524, %v867
      %v874 = vmul.f32 %v526, %v867
      %v875 = vmul.f32 %v529, %v867
      %v876 = vmul.f32 %v531, %v867
      %v877 = vmul.f32 %v534, %v867
      %v878 = vmul.f32 %v536, %v867
      %v879 = vmul.f32 %v539, %v867
      %v880 = vmul.f32 %v541, %v867
      %v881 = vmul.f32 %v544, %v867
      %v882 = vmul.f32 %v546, %v867
      %v883 = vmul.f32 %v549, %v867
      %v884 = vmul.f32 %v551, %v867
      %v885 = vmul.f32 %v554, %v867
      %v886 = vmul.f32 %v556, %v867
      %v887 = vmul.f32 %v559, %v867
      %v888 = vmul.f32 %v561, %v867
      %v889 = vmul.f32 %v564, %v867
      %v890 = vmul.f32 %v566, %v867
      %v891 = vmul.f32 %v569, %v867
      %v892 = vmul.f32 %v571, %v867
      %v893 = vmul.f32 %v574, %v867
      %v894 = vmul.f32 %v576, %v867
      %v895 = vmul.f32 %v579, %v867
      %v896 = vmul.f32 %v581, %v867
      %v897 = vmul.f32 %v584, %v867
      %v898 = vmul.f32 %v586, %v867
      %v899 = vmul.f32 %v589, %v867
      %v900 = vmul.f32 %v591, %v867
      %v901 = vmul.f32 %v594, %v867
      %v902 = vmul.f32 %v596, %v867
      %v903 = vmul.f32 %v599, %v867
      %v904 = vmul.f32 %v601, %v867
      %v905 = vmul.f32 %v604, %v867
      %v906 = vmul.f32 %v606, %v867
      %v908 = vperm.slane %v865, 0
      %v910 = vadd.f32 %v869, %v908
      %v911 = vadd.f32 %v870, %v908
      %v912 = vadd.f32 %v871, %v908
      %v913 = vadd.f32 %v872, %v908
      %v914 = vadd.f32 %v873, %v908
      %v915 = vadd.f32 %v874, %v908
      %v916 = vadd.f32 %v875, %v908
      %v917 = vadd.f32 %v876, %v908
      %v918 = vadd.f32 %v877, %v908
      %v919 = vadd.f32 %v878, %v908
      %v920 = vadd.f32 %v879, %v908
      %v921 = vadd.f32 %v880, %v908
      %v922 = vadd.f32 %v881, %v908
      %v923 = vadd.f32 %v882, %v908
      %v924 = vadd.f32 %v883, %v908
      %v925 = vadd.f32 %v884, %v908
      %v926 = vadd.f32 %v885, %v908
      %v927 = vadd.f32 %v886, %v908
      %v928 = vadd.f32 %v887, %v908
      %v929 = vadd.f32 %v888, %v908
      %v930 = vadd.f32 %v889, %v908
      %v931 = vadd.f32 %v890, %v908
      %v932 = vadd.f32 %v891, %v908
      %v933 = vadd.f32 %v892, %v908
      %v934 = vadd.f32 %v893, %v908
      %v935 = vadd.f32 %v894, %v908
      %v936 = vadd.f32 %v895, %v908
      %v937 = vadd.f32 %v896, %v908
      %v938 = vadd.f32 %v897, %v908
      %v939 = vadd.f32 %v898, %v908
      %v940 = vadd.f32 %v899, %v908
      %v941 = vadd.f32 %v900, %v908
      %v942 = vadd.f32 %v901, %v908
      %v943 = vadd.f32 %v902, %v908
      %v944 = vadd.f32 %v903, %v908
      %v945 = vadd.f32 %v904, %v908
      %v946 = vadd.f32 %v905, %v908
      %v947 = vadd.f32 %v906, %v908
      %v948 = vmul.f32 %v910, 0.5
      %v949 = vmul.f32 %v911, 0.5
      %v950 = vmul.f32 %v912, 0.5
      %v951 = vmul.f32 %v913, 0.5
      %v952 = vmul.f32 %v914, 0.5
      %v953 = vmul.f32 %v915, 0.5
      %v954 = vmul.f32 %v916, 0.5
      %v955 = vmul.f32 %v917, 0.5
      %v956 = vmul.f32 %v918, 0.5
      %v957 = vmul.f32 %v919, 0.5
      %v958 = vmul.f32 %v920, 0.5
      %v959 = vmul.f32 %v921, 0.5
      %v960 = vmul.f32 %v922, 0.5
      %v961 = vmul.f32 %v923, 0.5
      %v962 = vmul.f32 %v924, 0.5
      %v963 = vmul.f32 %v925, 0.5
      %v964 = vmul.f32 %v926, 0.5
      %v965 = vmul.f32 %v927, 0.5
      %v966 = vmul.f32 %v928, 0.5
      %v967 = vmul.f32 %v929, 0.5
      %v968 = vmul.f32 %v930, 0.5
      %v969 = vmul.f32 %v931, 0.5
      %v970 = vmul.f32 %v932, 0.5
      %v971 = vmul.f32 %v933, 0.5
      %v972 = vmul.f32 %v934, 0.5
      %v973 = vmul.f32 %v935, 0.5
      %v974 = vmul.f32 %v936, 0.5
      %v975 = vmul.f32 %v937, 0.5
      %v976 = vmul.f32 %v938, 0.5
      %v977 = vmul.f32 %v939, 0.5
      %v978 = vmul.f32 %v940, 0.5
      %v979 = vmul.f32 %v941, 0.5
      %v980 = vmul.f32 %v942, 0.5
      %v981 = vmul.f32 %v943, 0.5
      %v982 = vmul.f32 %v944, 0.5
      %v983 = vmul.f32 %v945, 0.5
      %v984 = vmul.f32 %v946, 0.5
      %v985 = vmul.f32 %v947, 0.5
      %v986 = vmul.f32 %v910, 0.70710677
      %v987 = vmul.f32 %v911, 0.70710677
      %v988 = vmul.f32 %v912, 0.70710677
      %v989 = vmul.f32 %v913, 0.70710677
      %v990 = vmul.f32 %v914, 0.70710677
      %v991 = vmul.f32 %v915, 0.70710677
      %v992 = vmul.f32 %v916, 0.70710677
      %v993 = vmul.f32 %v917, 0.70710677
      %v994 = vmul.f32 %v918, 0.70710677
      %v995 = vmul.f32 %v919, 0.70710677
      %v996 = vmul.f32 %v920, 0.70710677
      %v997 = vmul.f32 %v921, 0.70710677
      %v998 = vmul.f32 %v922, 0.70710677
      %v999 = vmul.f32 %v923, 0.70710677
      %v1000 = vmul.f32 %v924, 0.70710677
      %v1001 = vmul.f32 %v925, 0.70710677
      %v1002 = vmul.f32 %v926, 0.70710677
      %v1003 = vmul.f32 %v927, 0.70710677
      %v1004 = vmul.f32 %v928, 0.70710677
      %v1005 = vmul.f32 %v929, 0.70710677
      %v1006 = vmul.f32 %v930, 0.70710677
      %v1007 = vmul.f32 %v931, 0.70710677
      %v1008 = vmul.f32 %v932, 0.70710677
      %v1009 = vmul.f32 %v933, 0.70710677
      %v1010 = vmul.f32 %v934, 0.70710677
      %v1011 = vmul.f32 %v935, 0.70710677
      %v1012 = vmul.f32 %v936, 0.70710677
      %v1013 = vmul.f32 %v937, 0.70710677
      %v1014 = vmul.f32 %v938, 0.70710677
      %v1015 = vmul.f32 %v939, 0.70710677
      %v1016 = vmul.f32 %v940, 0.70710677
      %v1017 = vmul.f32 %v941, 0.70710677
      %v1018 = vmul.f32 %v942, 0.70710677
      %v1019 = vmul.f32 %v943, 0.70710677
      %v1020 = vmul.f32 %v944, 0.70710677
      %v1021 = vmul.f32 %v945, 0.70710677
      %v1022 = vmul.f32 %v946, 0.70710677
      %v1023 = vmul.f32 %v947, 0.70710677
      %vm1024 = vcmp.ge.f32.partialorder %v986, 0.0
      %vm1025 = vcmp.ge.f32.partialorder %v987, 0.0
      %vm1026 = vcmp.ge.f32.partialorder %v988, 0.0
      %vm1027 = vcmp.ge.f32.partialorder %v989, 0.0
      %vm1028 = vcmp.ge.f32.partialorder %v990, 0.0
      %vm1029 = vcmp.ge.f32.partialorder %v991, 0.0
      %vm1030 = vcmp.ge.f32.partialorder %v992, 0.0
      %vm1031 = vcmp.ge.f32.partialorder %v993, 0.0
      %vm1032 = vcmp.ge.f32.partialorder %v994, 0.0
      %vm1033 = vcmp.ge.f32.partialorder %v995, 0.0
      %vm1034 = vcmp.ge.f32.partialorder %v996, 0.0
      %vm1035 = vcmp.ge.f32.partialorder %v997, 0.0
      %vm1036 = vcmp.ge.f32.partialorder %v998, 0.0
      %vm1037 = vcmp.ge.f32.partialorder %v999, 0.0
      %vm1038 = vcmp.ge.f32.partialorder %v1000, 0.0
      %vm1039 = vcmp.ge.f32.partialorder %v1001, 0.0
      %vm1040 = vcmp.ge.f32.partialorder %v1002, 0.0
      %vm1041 = vcmp.ge.f32.partialorder %v1003, 0.0
      %vm1042 = vcmp.ge.f32.partialorder %v1004, 0.0
      %vm1043 = vcmp.ge.f32.partialorder %v1005, 0.0
      %vm1044 = vcmp.ge.f32.partialorder %v1006, 0.0
      %vm1045 = vcmp.ge.f32.partialorder %v1007, 0.0
      %vm1046 = vcmp.ge.f32.partialorder %v1008, 0.0
      %vm1047 = vcmp.ge.f32.partialorder %v1009, 0.0
      %vm1048 = vcmp.ge.f32.partialorder %v1010, 0.0
      %vm1049 = vcmp.ge.f32.partialorder %v1011, 0.0
      %vm1050 = vcmp.ge.f32.partialorder %v1012, 0.0
      %vm1051 = vcmp.ge.f32.partialorder %v1013, 0.0
      %vm1052 = vcmp.ge.f32.partialorder %v1014, 0.0
      %vm1053 = vcmp.ge.f32.partialorder %v1015, 0.0
      %vm1054 = vcmp.ge.f32.partialorder %v1016, 0.0
      %vm1055 = vcmp.ge.f32.partialorder %v1017, 0.0
      %vm1056 = vcmp.ge.f32.partialorder %v1018, 0.0
      %vm1057 = vcmp.ge.f32.partialorder %v1019, 0.0
      %vm1058 = vcmp.ge.f32.partialorder %v1020, 0.0
      %vm1059 = vcmp.ge.f32.partialorder %v1021, 0.0
      %vm1060 = vcmp.ge.f32.partialorder %v1022, 0.0
      %vm1061 = vcmp.ge.f32.partialorder %v1023, 0.0
      %v1062 = vsel %vm1024, 1.0, -1.0
      %v1063 = vsel %vm1025, 1.0, -1.0
      %v1064 = vsel %vm1026, 1.0, -1.0
      %v1065 = vsel %vm1027, 1.0, -1.0
      %v1066 = vsel %vm1028, 1.0, -1.0
      %v1067 = vsel %vm1029, 1.0, -1.0
      %v1068 = vsel %vm1030, 1.0, -1.0
      %v1069 = vsel %vm1031, 1.0, -1.0
      %v1070 = vsel %vm1032, 1.0, -1.0
      %v1071 = vsel %vm1033, 1.0, -1.0
      %v1072 = vsel %vm1034, 1.0, -1.0
      %v1073 = vsel %vm1035, 1.0, -1.0
      %v1074 = vsel %vm1036, 1.0, -1.0
      %v1075 = vsel %vm1037, 1.0, -1.0
      %v1076 = vsel %vm1038, 1.0, -1.0
      %v1077 = vsel %vm1039, 1.0, -1.0
      %v1078 = vsel %vm1040, 1.0, -1.0
      %v1079 = vsel %vm1041, 1.0, -1.0
      %v1080 = vsel %vm1042, 1.0, -1.0
      %v1081 = vsel %vm1043, 1.0, -1.0
      %v1082 = vsel %vm1044, 1.0, -1.0
      %v1083 = vsel %vm1045, 1.0, -1.0
      %v1084 = vsel %vm1046, 1.0, -1.0
      %v1085 = vsel %vm1047, 1.0, -1.0
      %v1086 = vsel %vm1048, 1.0, -1.0
      %v1087 = vsel %vm1049, 1.0, -1.0
      %v1088 = vsel %vm1050, 1.0, -1.0
      %v1089 = vsel %vm1051, 1.0, -1.0
      %v1090 = vsel %vm1052, 1.0, -1.0
      %v1091 = vsel %vm1053, 1.0, -1.0
      %v1092 = vsel %vm1054, 1.0, -1.0
      %v1093 = vsel %vm1055, 1.0, -1.0
      %v1094 = vsel %vm1056, 1.0, -1.0
      %v1095 = vsel %vm1057, 1.0, -1.0
      %v1096 = vsel %vm1058, 1.0, -1.0
      %v1097 = vsel %vm1059, 1.0, -1.0
      %v1098 = vsel %vm1060, 1.0, -1.0
      %v1099 = vsel %vm1061, 1.0, -1.0
      %v1100 = vand.u32 2147483647, %v986
      %v1101 = vand.u32 2147483647, %v987
      %v1102 = vand.u32 2147483647, %v988
      %v1103 = vand.u32 2147483647, %v989
      %v1104 = vand.u32 2147483647, %v990
      %v1105 = vand.u32 2147483647, %v991
      %v1106 = vand.u32 2147483647, %v992
      %v1107 = vand.u32 2147483647, %v993
      %v1108 = vand.u32 2147483647, %v994
      %v1109 = vand.u32 2147483647, %v995
      %v1110 = vand.u32 2147483647, %v996
      %v1111 = vand.u32 2147483647, %v997
      %v1112 = vand.u32 2147483647, %v998
      %v1113 = vand.u32 2147483647, %v999
      %v1114 = vand.u32 2147483647, %v1000
      %v1115 = vand.u32 2147483647, %v1001
      %v1116 = vand.u32 2147483647, %v1002
      %v1117 = vand.u32 2147483647, %v1003
      %v1118 = vand.u32 2147483647, %v1004
      %v1119 = vand.u32 2147483647, %v1005
      %v1120 = vand.u32 2147483647, %v1006
      %v1121 = vand.u32 2147483647, %v1007
      %v1122 = vand.u32 2147483647, %v1008
      %v1123 = vand.u32 2147483647, %v1009
      %v1124 = vand.u32 2147483647, %v1010
      %v1125 = vand.u32 2147483647, %v1011
      %v1126 = vand.u32 2147483647, %v1012
      %v1127 = vand.u32 2147483647, %v1013
      %v1128 = vand.u32 2147483647, %v1014
      %v1129 = vand.u32 2147483647, %v1015
      %v1130 = vand.u32 2147483647, %v1016
      %v1131 = vand.u32 2147483647, %v1017
      %v1132 = vand.u32 2147483647, %v1018
      %v1133 = vand.u32 2147483647, %v1019
      %v1134 = vand.u32 2147483647, %v1020
      %v1135 = vand.u32 2147483647, %v1021
      %v1136 = vand.u32 2147483647, %v1022
      %v1137 = vand.u32 2147483647, %v1023
      %v1138 = vmul.f32 %v1100, 0.3275911
      %v1139 = vmul.f32 %v1101, 0.3275911
      %v1140 = vmul.f32 %v1102, 0.3275911
      %v1141 = vmul.f32 %v1103, 0.3275911
      %v1142 = vmul.f32 %v1104, 0.3275911
      %v1143 = vmul.f32 %v1105, 0.3275911
      %v1144 = vmul.f32 %v1106, 0.3275911
      %v1145 = vmul.f32 %v1107, 0.3275911
      %v1146 = vmul.f32 %v1108, 0.3275911
      %v1147 = vmul.f32 %v1109, 0.3275911
      %v1148 = vmul.f32 %v1110, 0.3275911
      %v1149 = vmul.f32 %v1111, 0.3275911
      %v1150 = vmul.f32 %v1112, 0.3275911
      %v1151 = vmul.f32 %v1113, 0.3275911
      %v1152 = vmul.f32 %v1114, 0.3275911
      %v1153 = vmul.f32 %v1115, 0.3275911
      %v1154 = vmul.f32 %v1116, 0.3275911
      %v1155 = vmul.f32 %v1117, 0.3275911
      %v1156 = vmul.f32 %v1118, 0.3275911
      %v1157 = vmul.f32 %v1119, 0.3275911
      %v1158 = vmul.f32 %v1120, 0.3275911
      %v1159 = vmul.f32 %v1121, 0.3275911
      %v1160 = vmul.f32 %v1122, 0.3275911
      %v1161 = vmul.f32 %v1123, 0.3275911
      %v1162 = vmul.f32 %v1124, 0.3275911
      %v1163 = vmul.f32 %v1125, 0.3275911
      %v1164 = vmul.f32 %v1126, 0.3275911
      %v1165 = vmul.f32 %v1127, 0.3275911
      %v1166 = vmul.f32 %v1128, 0.3275911
      %v1167 = vmul.f32 %v1129, 0.3275911
      %v1168 = vmul.f32 %v1130, 0.3275911
      %v1169 = vmul.f32 %v1131, 0.3275911
      %v1170 = vmul.f32 %v1132, 0.3275911
      %v1171 = vmul.f32 %v1133, 0.3275911
      %v1172 = vmul.f32 %v1134, 0.3275911
      %v1173 = vmul.f32 %v1135, 0.3275911
      %v1174 = vmul.f32 %v1136, 0.3275911
      %v1175 = vmul.f32 %v1137, 0.3275911
      %v1176 = vadd.f32 %v1138, 1.0
      %v1177 = vadd.f32 %v1139, 1.0
      %v1178 = vadd.f32 %v1140, 1.0
      %v1179 = vadd.f32 %v1141, 1.0
      %v1180 = vadd.f32 %v1142, 1.0
      %v1181 = vadd.f32 %v1143, 1.0
      %v1182 = vadd.f32 %v1144, 1.0
      %v1183 = vadd.f32 %v1145, 1.0
      %v1184 = vadd.f32 %v1146, 1.0
      %v1185 = vadd.f32 %v1147, 1.0
      %v1186 = vadd.f32 %v1148, 1.0
      %v1187 = vadd.f32 %v1149, 1.0
      %v1188 = vadd.f32 %v1150, 1.0
      %v1189 = vadd.f32 %v1151, 1.0
      %v1190 = vadd.f32 %v1152, 1.0
      %v1191 = vadd.f32 %v1153, 1.0
      %v1192 = vadd.f32 %v1154, 1.0
      %v1193 = vadd.f32 %v1155, 1.0
      %v1194 = vadd.f32 %v1156, 1.0
      %v1195 = vadd.f32 %v1157, 1.0
      %v1196 = vadd.f32 %v1158, 1.0
      %v1197 = vadd.f32 %v1159, 1.0
      %v1198 = vadd.f32 %v1160, 1.0
      %v1199 = vadd.f32 %v1161, 1.0
      %v1200 = vadd.f32 %v1162, 1.0
      %v1201 = vadd.f32 %v1163, 1.0
      %v1202 = vadd.f32 %v1164, 1.0
      %v1203 = vadd.f32 %v1165, 1.0
      %v1204 = vadd.f32 %v1166, 1.0
      %v1205 = vadd.f32 %v1167, 1.0
      %v1206 = vadd.f32 %v1168, 1.0
      %v1207 = vadd.f32 %v1169, 1.0
      %v1208 = vadd.f32 %v1170, 1.0
      %v1209 = vadd.f32 %v1171, 1.0
      %v1210 = vadd.f32 %v1172, 1.0
      %v1211 = vadd.f32 %v1173, 1.0
      %v1212 = vadd.f32 %v1174, 1.0
      %v1213 = vadd.f32 %v1175, 1.0
      %v1214 = vrcp.pop %v1176
      %v1215 = vmul.f32 %v1176, %v1214
      %v1216 = vsub.f32 1.0, %v1215
      %v1217 = vmul.f32 %v1214, %v1216
      %v1218 = vadd.f32 %v1214, %v1217
      %vm1219 = vweird.f32 %v1176
      %vm1220 = vweird.f32 %v1214
      %vm1221 = vmor %vm1219, %vm1220
      %v1222 = vsel %vm1221, %v1214, %v1218
      %v1223 = vand.u32 2147483647, %v1176
      %vm1224 = vcmp.eq.f32.partialorder %v1223, 8.507059e+37
      %v1225 = vand.u32 %v1176, 2147483648
      %v1226 = vor.u32 1.1754944e-38, %v1225
      %v1227 = vsel %vm1224, %v1226, %v1222
      %v1228 = vmul.f32 1.0, %v1227
      %v1229 = vrcp.pop %v1177
      %v1230 = vmul.f32 %v1177, %v1229
      %v1231 = vsub.f32 1.0, %v1230
      %v1232 = vmul.f32 %v1229, %v1231
      %v1233 = vadd.f32 %v1229, %v1232
      %vm1234 = vweird.f32 %v1177
      %vm1235 = vweird.f32 %v1229
      %vm1236 = vmor %vm1234, %vm1235
      %v1237 = vsel %vm1236, %v1229, %v1233
      %v1238 = vand.u32 2147483647, %v1177
      %vm1239 = vcmp.eq.f32.partialorder %v1238, 8.507059e+37
      %v1240 = vand.u32 %v1177, 2147483648
      %v1241 = vor.u32 1.1754944e-38, %v1240
      %v1242 = vsel %vm1239, %v1241, %v1237
      %v1243 = vmul.f32 1.0, %v1242
      %v1244 = vrcp.pop %v1178
      %v1245 = vmul.f32 %v1178, %v1244
      %v1246 = vsub.f32 1.0, %v1245
      %v1247 = vmul.f32 %v1244, %v1246
      %v1248 = vadd.f32 %v1244, %v1247
      %vm1249 = vweird.f32 %v1178
      %vm1250 = vweird.f32 %v1244
      %vm1251 = vmor %vm1249, %vm1250
      %v1252 = vsel %vm1251, %v1244, %v1248
      %v1253 = vand.u32 2147483647, %v1178
      %vm1254 = vcmp.eq.f32.partialorder %v1253, 8.507059e+37
      %v1255 = vand.u32 %v1178, 2147483648
      %v1256 = vor.u32 1.1754944e-38, %v1255
      %v1257 = vsel %vm1254, %v1256, %v1252
      %v1258 = vmul.f32 1.0, %v1257
      %v1259 = vrcp.pop %v1179
      %v1260 = vmul.f32 %v1179, %v1259
      %v1261 = vsub.f32 1.0, %v1260
      %v1262 = vmul.f32 %v1259, %v1261
      %v1263 = vadd.f32 %v1259, %v1262
      %vm1264 = vweird.f32 %v1179
      %vm1265 = vweird.f32 %v1259
      %vm1266 = vmor %vm1264, %vm1265
      %v1267 = vsel %vm1266, %v1259, %v1263
      %v1268 = vand.u32 2147483647, %v1179
      %vm1269 = vcmp.eq.f32.partialorder %v1268, 8.507059e+37
      %v1270 = vand.u32 %v1179, 2147483648
      %v1271 = vor.u32 1.1754944e-38, %v1270
      %v1272 = vsel %vm1269, %v1271, %v1267
      %v1273 = vmul.f32 1.0, %v1272
      %v1274 = vrcp.pop %v1180
      %v1275 = vmul.f32 %v1180, %v1274
      %v1276 = vsub.f32 1.0, %v1275
      %v1277 = vmul.f32 %v1274, %v1276
      %v1278 = vadd.f32 %v1274, %v1277
      %vm1279 = vweird.f32 %v1180
      %vm1280 = vweird.f32 %v1274
      %vm1281 = vmor %vm1279, %vm1280
      %v1282 = vsel %vm1281, %v1274, %v1278
      %v1283 = vand.u32 2147483647, %v1180
      %vm1284 = vcmp.eq.f32.partialorder %v1283, 8.507059e+37
      %v1285 = vand.u32 %v1180, 2147483648
      %v1286 = vor.u32 1.1754944e-38, %v1285
      %v1287 = vsel %vm1284, %v1286, %v1282
      %v1288 = vmul.f32 1.0, %v1287
      %v1289 = vrcp.pop %v1181
      %v1290 = vmul.f32 %v1181, %v1289
      %v1291 = vsub.f32 1.0, %v1290
      %v1292 = vmul.f32 %v1289, %v1291
      %v1293 = vadd.f32 %v1289, %v1292
      %vm1294 = vweird.f32 %v1181
      %vm1295 = vweird.f32 %v1289
      %vm1296 = vmor %vm1294, %vm1295
      %v1297 = vsel %vm1296, %v1289, %v1293
      %v1298 = vand.u32 2147483647, %v1181
      %vm1299 = vcmp.eq.f32.partialorder %v1298, 8.507059e+37
      %v1300 = vand.u32 %v1181, 2147483648
      %v1301 = vor.u32 1.1754944e-38, %v1300
      %v1302 = vsel %vm1299, %v1301, %v1297
      %v1303 = vmul.f32 1.0, %v1302
      %v1304 = vrcp.pop %v1182
      %v1305 = vmul.f32 %v1182, %v1304
      %v1306 = vsub.f32 1.0, %v1305
      %v1307 = vmul.f32 %v1304, %v1306
      %v1308 = vadd.f32 %v1304, %v1307
      %vm1309 = vweird.f32 %v1182
      %vm1310 = vweird.f32 %v1304
      %vm1311 = vmor %vm1309, %vm1310
      %v1312 = vsel %vm1311, %v1304, %v1308
      %v1313 = vand.u32 2147483647, %v1182
      %vm1314 = vcmp.eq.f32.partialorder %v1313, 8.507059e+37
      %v1315 = vand.u32 %v1182, 2147483648
      %v1316 = vor.u32 1.1754944e-38, %v1315
      %v1317 = vsel %vm1314, %v1316, %v1312
      %v1318 = vmul.f32 1.0, %v1317
      %v1319 = vrcp.pop %v1183
      %v1320 = vmul.f32 %v1183, %v1319
      %v1321 = vsub.f32 1.0, %v1320
      %v1322 = vmul.f32 %v1319, %v1321
      %v1323 = vadd.f32 %v1319, %v1322
      %vm1324 = vweird.f32 %v1183
      %vm1325 = vweird.f32 %v1319
      %vm1326 = vmor %vm1324, %vm1325
      %v1327 = vsel %vm1326, %v1319, %v1323
      %v1328 = vand.u32 2147483647, %v1183
      %vm1329 = vcmp.eq.f32.partialorder %v1328, 8.507059e+37
      %v1330 = vand.u32 %v1183, 2147483648
      %v1331 = vor.u32 1.1754944e-38, %v1330
      %v1332 = vsel %vm1329, %v1331, %v1327
      %v1333 = vmul.f32 1.0, %v1332
      %v1334 = vrcp.pop %v1184
      %v1335 = vmul.f32 %v1184, %v1334
      %v1336 = vsub.f32 1.0, %v1335
      %v1337 = vmul.f32 %v1334, %v1336
      %v1338 = vadd.f32 %v1334, %v1337
      %vm1339 = vweird.f32 %v1184
      %vm1340 = vweird.f32 %v1334
      %vm1341 = vmor %vm1339, %vm1340
      %v1342 = vsel %vm1341, %v1334, %v1338
      %v1343 = vand.u32 2147483647, %v1184
      %vm1344 = vcmp.eq.f32.partialorder %v1343, 8.507059e+37
      %v1345 = vand.u32 %v1184, 2147483648
      %v1346 = vor.u32 1.1754944e-38, %v1345
      %v1347 = vsel %vm1344, %v1346, %v1342
      %v1348 = vmul.f32 1.0, %v1347
      %v1349 = vrcp.pop %v1185
      %v1350 = vmul.f32 %v1185, %v1349
      %v1351 = vsub.f32 1.0, %v1350
      %v1352 = vmul.f32 %v1349, %v1351
      %v1353 = vadd.f32 %v1349, %v1352
      %vm1354 = vweird.f32 %v1185
      %vm1355 = vweird.f32 %v1349
      %vm1356 = vmor %vm1354, %vm1355
      %v1357 = vsel %vm1356, %v1349, %v1353
      %v1358 = vand.u32 2147483647, %v1185
      %vm1359 = vcmp.eq.f32.partialorder %v1358, 8.507059e+37
      %v1360 = vand.u32 %v1185, 2147483648
      %v1361 = vor.u32 1.1754944e-38, %v1360
      %v1362 = vsel %vm1359, %v1361, %v1357
      %v1363 = vmul.f32 1.0, %v1362
      %v1364 = vrcp.pop %v1186
      %v1365 = vmul.f32 %v1186, %v1364
      %v1366 = vsub.f32 1.0, %v1365
      %v1367 = vmul.f32 %v1364, %v1366
      %v1368 = vadd.f32 %v1364, %v1367
      %vm1369 = vweird.f32 %v1186
      %vm1370 = vweird.f32 %v1364
      %vm1371 = vmor %vm1369, %vm1370
      %v1372 = vsel %vm1371, %v1364, %v1368
      %v1373 = vand.u32 2147483647, %v1186
      %vm1374 = vcmp.eq.f32.partialorder %v1373, 8.507059e+37
      %v1375 = vand.u32 %v1186, 2147483648
      %v1376 = vor.u32 1.1754944e-38, %v1375
      %v1377 = vsel %vm1374, %v1376, %v1372
      %v1378 = vmul.f32 1.0, %v1377
      %v1379 = vrcp.pop %v1187
      %v1380 = vmul.f32 %v1187, %v1379
      %v1381 = vsub.f32 1.0, %v1380
      %v1382 = vmul.f32 %v1379, %v1381
      %v1383 = vadd.f32 %v1379, %v1382
      %vm1384 = vweird.f32 %v1187
      %vm1385 = vweird.f32 %v1379
      %vm1386 = vmor %vm1384, %vm1385
      %v1387 = vsel %vm1386, %v1379, %v1383
      %v1388 = vand.u32 2147483647, %v1187
      %vm1389 = vcmp.eq.f32.partialorder %v1388, 8.507059e+37
      %v1390 = vand.u32 %v1187, 2147483648
      %v1391 = vor.u32 1.1754944e-38, %v1390
      %v1392 = vsel %vm1389, %v1391, %v1387
      %v1393 = vmul.f32 1.0, %v1392
      %v1394 = vrcp.pop %v1188
      %v1395 = vmul.f32 %v1188, %v1394
      %v1396 = vsub.f32 1.0, %v1395
      %v1397 = vmul.f32 %v1394, %v1396
      %v1398 = vadd.f32 %v1394, %v1397
      %vm1399 = vweird.f32 %v1188
      %vm1400 = vweird.f32 %v1394
      %vm1401 = vmor %vm1399, %vm1400
      %v1402 = vsel %vm1401, %v1394, %v1398
      %v1403 = vand.u32 2147483647, %v1188
      %vm1404 = vcmp.eq.f32.partialorder %v1403, 8.507059e+37
      %v1405 = vand.u32 %v1188, 2147483648
      %v1406 = vor.u32 1.1754944e-38, %v1405
      %v1407 = vsel %vm1404, %v1406, %v1402
      %v1408 = vmul.f32 1.0, %v1407
      %v1409 = vrcp.pop %v1189
      %v1410 = vmul.f32 %v1189, %v1409
      %v1411 = vsub.f32 1.0, %v1410
      %v1412 = vmul.f32 %v1409, %v1411
      %v1413 = vadd.f32 %v1409, %v1412
      %vm1414 = vweird.f32 %v1189
      %vm1415 = vweird.f32 %v1409
      %vm1416 = vmor %vm1414, %vm1415
      %v1417 = vsel %vm1416, %v1409, %v1413
      %v1418 = vand.u32 2147483647, %v1189
      %vm1419 = vcmp.eq.f32.partialorder %v1418, 8.507059e+37
      %v1420 = vand.u32 %v1189, 2147483648
      %v1421 = vor.u32 1.1754944e-38, %v1420
      %v1422 = vsel %vm1419, %v1421, %v1417
      %v1423 = vmul.f32 1.0, %v1422
      %v1424 = vrcp.pop %v1190
      %v1425 = vmul.f32 %v1190, %v1424
      %v1426 = vsub.f32 1.0, %v1425
      %v1427 = vmul.f32 %v1424, %v1426
      %v1428 = vadd.f32 %v1424, %v1427
      %vm1429 = vweird.f32 %v1190
      %vm1430 = vweird.f32 %v1424
      %vm1431 = vmor %vm1429, %vm1430
      %v1432 = vsel %vm1431, %v1424, %v1428
      %v1433 = vand.u32 2147483647, %v1190
      %vm1434 = vcmp.eq.f32.partialorder %v1433, 8.507059e+37
      %v1435 = vand.u32 %v1190, 2147483648
      %v1436 = vor.u32 1.1754944e-38, %v1435
      %v1437 = vsel %vm1434, %v1436, %v1432
      %v1438 = vmul.f32 1.0, %v1437
      %v1439 = vrcp.pop %v1191
      %v1440 = vmul.f32 %v1191, %v1439
      %v1441 = vsub.f32 1.0, %v1440
      %v1442 = vmul.f32 %v1439, %v1441
      %v1443 = vadd.f32 %v1439, %v1442
      %vm1444 = vweird.f32 %v1191
      %vm1445 = vweird.f32 %v1439
      %vm1446 = vmor %vm1444, %vm1445
      %v1447 = vsel %vm1446, %v1439, %v1443
      %v1448 = vand.u32 2147483647, %v1191
      %vm1449 = vcmp.eq.f32.partialorder %v1448, 8.507059e+37
      %v1450 = vand.u32 %v1191, 2147483648
      %v1451 = vor.u32 1.1754944e-38, %v1450
      %v1452 = vsel %vm1449, %v1451, %v1447
      %v1453 = vmul.f32 1.0, %v1452
      %v1454 = vrcp.pop %v1192
      %v1455 = vmul.f32 %v1192, %v1454
      %v1456 = vsub.f32 1.0, %v1455
      %v1457 = vmul.f32 %v1454, %v1456
      %v1458 = vadd.f32 %v1454, %v1457
      %vm1459 = vweird.f32 %v1192
      %vm1460 = vweird.f32 %v1454
      %vm1461 = vmor %vm1459, %vm1460
      %v1462 = vsel %vm1461, %v1454, %v1458
      %v1463 = vand.u32 2147483647, %v1192
      %vm1464 = vcmp.eq.f32.partialorder %v1463, 8.507059e+37
      %v1465 = vand.u32 %v1192, 2147483648
      %v1466 = vor.u32 1.1754944e-38, %v1465
      %v1467 = vsel %vm1464, %v1466, %v1462
      %v1468 = vmul.f32 1.0, %v1467
      %v1469 = vrcp.pop %v1193
      %v1470 = vmul.f32 %v1193, %v1469
      %v1471 = vsub.f32 1.0, %v1470
      %v1472 = vmul.f32 %v1469, %v1471
      %v1473 = vadd.f32 %v1469, %v1472
      %vm1474 = vweird.f32 %v1193
      %vm1475 = vweird.f32 %v1469
      %vm1476 = vmor %vm1474, %vm1475
      %v1477 = vsel %vm1476, %v1469, %v1473
      %v1478 = vand.u32 2147483647, %v1193
      %vm1479 = vcmp.eq.f32.partialorder %v1478, 8.507059e+37
      %v1480 = vand.u32 %v1193, 2147483648
      %v1481 = vor.u32 1.1754944e-38, %v1480
      %v1482 = vsel %vm1479, %v1481, %v1477
      %v1483 = vmul.f32 1.0, %v1482
      %v1484 = vrcp.pop %v1194
      %v1485 = vmul.f32 %v1194, %v1484
      %v1486 = vsub.f32 1.0, %v1485
      %v1487 = vmul.f32 %v1484, %v1486
      %v1488 = vadd.f32 %v1484, %v1487
      %vm1489 = vweird.f32 %v1194
      %vm1490 = vweird.f32 %v1484
      %vm1491 = vmor %vm1489, %vm1490
      %v1492 = vsel %vm1491, %v1484, %v1488
      %v1493 = vand.u32 2147483647, %v1194
      %vm1494 = vcmp.eq.f32.partialorder %v1493, 8.507059e+37
      %v1495 = vand.u32 %v1194, 2147483648
      %v1496 = vor.u32 1.1754944e-38, %v1495
      %v1497 = vsel %vm1494, %v1496, %v1492
      %v1498 = vmul.f32 1.0, %v1497
      %v1499 = vrcp.pop %v1195
      %v1500 = vmul.f32 %v1195, %v1499
      %v1501 = vsub.f32 1.0, %v1500
      %v1502 = vmul.f32 %v1499, %v1501
      %v1503 = vadd.f32 %v1499, %v1502
      %vm1504 = vweird.f32 %v1195
      %vm1505 = vweird.f32 %v1499
      %vm1506 = vmor %vm1504, %vm1505
      %v1507 = vsel %vm1506, %v1499, %v1503
      %v1508 = vand.u32 2147483647, %v1195
      %vm1509 = vcmp.eq.f32.partialorder %v1508, 8.507059e+37
      %v1510 = vand.u32 %v1195, 2147483648
      %v1511 = vor.u32 1.1754944e-38, %v1510
      %v1512 = vsel %vm1509, %v1511, %v1507
      %v1513 = vmul.f32 1.0, %v1512
      %v1514 = vrcp.pop %v1196
      %v1515 = vmul.f32 %v1196, %v1514
      %v1516 = vsub.f32 1.0, %v1515
      %v1517 = vmul.f32 %v1514, %v1516
      %v1518 = vadd.f32 %v1514, %v1517
      %vm1519 = vweird.f32 %v1196
      %vm1520 = vweird.f32 %v1514
      %vm1521 = vmor %vm1519, %vm1520
      %v1522 = vsel %vm1521, %v1514, %v1518
      %v1523 = vand.u32 2147483647, %v1196
      %vm1524 = vcmp.eq.f32.partialorder %v1523, 8.507059e+37
      %v1525 = vand.u32 %v1196, 2147483648
      %v1526 = vor.u32 1.1754944e-38, %v1525
      %v1527 = vsel %vm1524, %v1526, %v1522
      %v1528 = vmul.f32 1.0, %v1527
      %v1529 = vrcp.pop %v1197
      %v1530 = vmul.f32 %v1197, %v1529
      %v1531 = vsub.f32 1.0, %v1530
      %v1532 = vmul.f32 %v1529, %v1531
      %v1533 = vadd.f32 %v1529, %v1532
      %vm1534 = vweird.f32 %v1197
      %vm1535 = vweird.f32 %v1529
      %vm1536 = vmor %vm1534, %vm1535
      %v1537 = vsel %vm1536, %v1529, %v1533
      %v1538 = vand.u32 2147483647, %v1197
      %vm1539 = vcmp.eq.f32.partialorder %v1538, 8.507059e+37
      %v1540 = vand.u32 %v1197, 2147483648
      %v1541 = vor.u32 1.1754944e-38, %v1540
      %v1542 = vsel %vm1539, %v1541, %v1537
      %v1543 = vmul.f32 1.0, %v1542
      %v1544 = vrcp.pop %v1198
      %v1545 = vmul.f32 %v1198, %v1544
      %v1546 = vsub.f32 1.0, %v1545
      %v1547 = vmul.f32 %v1544, %v1546
      %v1548 = vadd.f32 %v1544, %v1547
      %vm1549 = vweird.f32 %v1198
      %vm1550 = vweird.f32 %v1544
      %vm1551 = vmor %vm1549, %vm1550
      %v1552 = vsel %vm1551, %v1544, %v1548
      %v1553 = vand.u32 2147483647, %v1198
      %vm1554 = vcmp.eq.f32.partialorder %v1553, 8.507059e+37
      %v1555 = vand.u32 %v1198, 2147483648
      %v1556 = vor.u32 1.1754944e-38, %v1555
      %v1557 = vsel %vm1554, %v1556, %v1552
      %v1558 = vmul.f32 1.0, %v1557
      %v1559 = vrcp.pop %v1199
      %v1560 = vmul.f32 %v1199, %v1559
      %v1561 = vsub.f32 1.0, %v1560
      %v1562 = vmul.f32 %v1559, %v1561
      %v1563 = vadd.f32 %v1559, %v1562
      %vm1564 = vweird.f32 %v1199
      %vm1565 = vweird.f32 %v1559
      %vm1566 = vmor %vm1564, %vm1565
      %v1567 = vsel %vm1566, %v1559, %v1563
      %v1568 = vand.u32 2147483647, %v1199
      %vm1569 = vcmp.eq.f32.partialorder %v1568, 8.507059e+37
      %v1570 = vand.u32 %v1199, 2147483648
      %v1571 = vor.u32 1.1754944e-38, %v1570
      %v1572 = vsel %vm1569, %v1571, %v1567
      %v1573 = vmul.f32 1.0, %v1572
      %v1574 = vrcp.pop %v1200
      %v1575 = vmul.f32 %v1200, %v1574
      %v1576 = vsub.f32 1.0, %v1575
      %v1577 = vmul.f32 %v1574, %v1576
      %v1578 = vadd.f32 %v1574, %v1577
      %vm1579 = vweird.f32 %v1200
      %vm1580 = vweird.f32 %v1574
      %vm1581 = vmor %vm1579, %vm1580
      %v1582 = vsel %vm1581, %v1574, %v1578
      %v1583 = vand.u32 2147483647, %v1200
      %vm1584 = vcmp.eq.f32.partialorder %v1583, 8.507059e+37
      %v1585 = vand.u32 %v1200, 2147483648
      %v1586 = vor.u32 1.1754944e-38, %v1585
      %v1587 = vsel %vm1584, %v1586, %v1582
      %v1588 = vmul.f32 1.0, %v1587
      %v1589 = vrcp.pop %v1201
      %v1590 = vmul.f32 %v1201, %v1589
      %v1591 = vsub.f32 1.0, %v1590
      %v1592 = vmul.f32 %v1589, %v1591
      %v1593 = vadd.f32 %v1589, %v1592
      %vm1594 = vweird.f32 %v1201
      %vm1595 = vweird.f32 %v1589
      %vm1596 = vmor %vm1594, %vm1595
      %v1597 = vsel %vm1596, %v1589, %v1593
      %v1598 = vand.u32 2147483647, %v1201
      %vm1599 = vcmp.eq.f32.partialorder %v1598, 8.507059e+37
      %v1600 = vand.u32 %v1201, 2147483648
      %v1601 = vor.u32 1.1754944e-38, %v1600
      %v1602 = vsel %vm1599, %v1601, %v1597
      %v1603 = vmul.f32 1.0, %v1602
      %v1604 = vrcp.pop %v1202
      %v1605 = vmul.f32 %v1202, %v1604
      %v1606 = vsub.f32 1.0, %v1605
      %v1607 = vmul.f32 %v1604, %v1606
      %v1608 = vadd.f32 %v1604, %v1607
      %vm1609 = vweird.f32 %v1202
      %vm1610 = vweird.f32 %v1604
      %vm1611 = vmor %vm1609, %vm1610
      %v1612 = vsel %vm1611, %v1604, %v1608
      %v1613 = vand.u32 2147483647, %v1202
      %vm1614 = vcmp.eq.f32.partialorder %v1613, 8.507059e+37
      %v1615 = vand.u32 %v1202, 2147483648
      %v1616 = vor.u32 1.1754944e-38, %v1615
      %v1617 = vsel %vm1614, %v1616, %v1612
      %v1618 = vmul.f32 1.0, %v1617
      %v1619 = vrcp.pop %v1203
      %v1620 = vmul.f32 %v1203, %v1619
      %v1621 = vsub.f32 1.0, %v1620
      %v1622 = vmul.f32 %v1619, %v1621
      %v1623 = vadd.f32 %v1619, %v1622
      %vm1624 = vweird.f32 %v1203
      %vm1625 = vweird.f32 %v1619
      %vm1626 = vmor %vm1624, %vm1625
      %v1627 = vsel %vm1626, %v1619, %v1623
      %v1628 = vand.u32 2147483647, %v1203
      %vm1629 = vcmp.eq.f32.partialorder %v1628, 8.507059e+37
      %v1630 = vand.u32 %v1203, 2147483648
      %v1631 = vor.u32 1.1754944e-38, %v1630
      %v1632 = vsel %vm1629, %v1631, %v1627
      %v1633 = vmul.f32 1.0, %v1632
      %v1634 = vrcp.pop %v1204
      %v1635 = vmul.f32 %v1204, %v1634
      %v1636 = vsub.f32 1.0, %v1635
      %v1637 = vmul.f32 %v1634, %v1636
      %v1638 = vadd.f32 %v1634, %v1637
      %vm1639 = vweird.f32 %v1204
      %vm1640 = vweird.f32 %v1634
      %vm1641 = vmor %vm1639, %vm1640
      %v1642 = vsel %vm1641, %v1634, %v1638
      %v1643 = vand.u32 2147483647, %v1204
      %vm1644 = vcmp.eq.f32.partialorder %v1643, 8.507059e+37
      %v1645 = vand.u32 %v1204, 2147483648
      %v1646 = vor.u32 1.1754944e-38, %v1645
      %v1647 = vsel %vm1644, %v1646, %v1642
      %v1648 = vmul.f32 1.0, %v1647
      %v1649 = vrcp.pop %v1205
      %v1650 = vmul.f32 %v1205, %v1649
      %v1651 = vsub.f32 1.0, %v1650
      %v1652 = vmul.f32 %v1649, %v1651
      %v1653 = vadd.f32 %v1649, %v1652
      %vm1654 = vweird.f32 %v1205
      %vm1655 = vweird.f32 %v1649
      %vm1656 = vmor %vm1654, %vm1655
      %v1657 = vsel %vm1656, %v1649, %v1653
      %v1658 = vand.u32 2147483647, %v1205
      %vm1659 = vcmp.eq.f32.partialorder %v1658, 8.507059e+37
      %v1660 = vand.u32 %v1205, 2147483648
      %v1661 = vor.u32 1.1754944e-38, %v1660
      %v1662 = vsel %vm1659, %v1661, %v1657
      %v1663 = vmul.f32 1.0, %v1662
      %v1664 = vrcp.pop %v1206
      %v1665 = vmul.f32 %v1206, %v1664
      %v1666 = vsub.f32 1.0, %v1665
      %v1667 = vmul.f32 %v1664, %v1666
      %v1668 = vadd.f32 %v1664, %v1667
      %vm1669 = vweird.f32 %v1206
      %vm1670 = vweird.f32 %v1664
      %vm1671 = vmor %vm1669, %vm1670
      %v1672 = vsel %vm1671, %v1664, %v1668
      %v1673 = vand.u32 2147483647, %v1206
      %vm1674 = vcmp.eq.f32.partialorder %v1673, 8.507059e+37
      %v1675 = vand.u32 %v1206, 2147483648
      %v1676 = vor.u32 1.1754944e-38, %v1675
      %v1677 = vsel %vm1674, %v1676, %v1672
      %v1678 = vmul.f32 1.0, %v1677
      %v1679 = vrcp.pop %v1207
      %v1680 = vmul.f32 %v1207, %v1679
      %v1681 = vsub.f32 1.0, %v1680
      %v1682 = vmul.f32 %v1679, %v1681
      %v1683 = vadd.f32 %v1679, %v1682
      %vm1684 = vweird.f32 %v1207
      %vm1685 = vweird.f32 %v1679
      %vm1686 = vmor %vm1684, %vm1685
      %v1687 = vsel %vm1686, %v1679, %v1683
      %v1688 = vand.u32 2147483647, %v1207
      %vm1689 = vcmp.eq.f32.partialorder %v1688, 8.507059e+37
      %v1690 = vand.u32 %v1207, 2147483648
      %v1691 = vor.u32 1.1754944e-38, %v1690
      %v1692 = vsel %vm1689, %v1691, %v1687
      %v1693 = vmul.f32 1.0, %v1692
      %v1694 = vrcp.pop %v1208
      %v1695 = vmul.f32 %v1208, %v1694
      %v1696 = vsub.f32 1.0, %v1695
      %v1697 = vmul.f32 %v1694, %v1696
      %v1698 = vadd.f32 %v1694, %v1697
      %vm1699 = vweird.f32 %v1208
      %vm1700 = vweird.f32 %v1694
      %vm1701 = vmor %vm1699, %vm1700
      %v1702 = vsel %vm1701, %v1694, %v1698
      %v1703 = vand.u32 2147483647, %v1208
      %vm1704 = vcmp.eq.f32.partialorder %v1703, 8.507059e+37
      %v1705 = vand.u32 %v1208, 2147483648
      %v1706 = vor.u32 1.1754944e-38, %v1705
      %v1707 = vsel %vm1704, %v1706, %v1702
      %v1708 = vmul.f32 1.0, %v1707
      %v1709 = vrcp.pop %v1209
      %v1710 = vmul.f32 %v1209, %v1709
      %v1711 = vsub.f32 1.0, %v1710
      %v1712 = vmul.f32 %v1709, %v1711
      %v1713 = vadd.f32 %v1709, %v1712
      %vm1714 = vweird.f32 %v1209
      %vm1715 = vweird.f32 %v1709
      %vm1716 = vmor %vm1714, %vm1715
      %v1717 = vsel %vm1716, %v1709, %v1713
      %v1718 = vand.u32 2147483647, %v1209
      %vm1719 = vcmp.eq.f32.partialorder %v1718, 8.507059e+37
      %v1720 = vand.u32 %v1209, 2147483648
      %v1721 = vor.u32 1.1754944e-38, %v1720
      %v1722 = vsel %vm1719, %v1721, %v1717
      %v1723 = vmul.f32 1.0, %v1722
      %v1724 = vrcp.pop %v1210
      %v1725 = vmul.f32 %v1210, %v1724
      %v1726 = vsub.f32 1.0, %v1725
      %v1727 = vmul.f32 %v1724, %v1726
      %v1728 = vadd.f32 %v1724, %v1727
      %vm1729 = vweird.f32 %v1210
      %vm1730 = vweird.f32 %v1724
      %vm1731 = vmor %vm1729, %vm1730
      %v1732 = vsel %vm1731, %v1724, %v1728
      %v1733 = vand.u32 2147483647, %v1210
      %vm1734 = vcmp.eq.f32.partialorder %v1733, 8.507059e+37
      %v1735 = vand.u32 %v1210, 2147483648
      %v1736 = vor.u32 1.1754944e-38, %v1735
      %v1737 = vsel %vm1734, %v1736, %v1732
      %v1738 = vmul.f32 1.0, %v1737
      %v1739 = vrcp.pop %v1211
      %v1740 = vmul.f32 %v1211, %v1739
      %v1741 = vsub.f32 1.0, %v1740
      %v1742 = vmul.f32 %v1739, %v1741
      %v1743 = vadd.f32 %v1739, %v1742
      %vm1744 = vweird.f32 %v1211
      %vm1745 = vweird.f32 %v1739
      %vm1746 = vmor %vm1744, %vm1745
      %v1747 = vsel %vm1746, %v1739, %v1743
      %v1748 = vand.u32 2147483647, %v1211
      %vm1749 = vcmp.eq.f32.partialorder %v1748, 8.507059e+37
      %v1750 = vand.u32 %v1211, 2147483648
      %v1751 = vor.u32 1.1754944e-38, %v1750
      %v1752 = vsel %vm1749, %v1751, %v1747
      %v1753 = vmul.f32 1.0, %v1752
      %v1754 = vrcp.pop %v1212
      %v1755 = vmul.f32 %v1212, %v1754
      %v1756 = vsub.f32 1.0, %v1755
      %v1757 = vmul.f32 %v1754, %v1756
      %v1758 = vadd.f32 %v1754, %v1757
      %vm1759 = vweird.f32 %v1212
      %vm1760 = vweird.f32 %v1754
      %vm1761 = vmor %vm1759, %vm1760
      %v1762 = vsel %vm1761, %v1754, %v1758
      %v1763 = vand.u32 2147483647, %v1212
      %vm1764 = vcmp.eq.f32.partialorder %v1763, 8.507059e+37
      %v1765 = vand.u32 %v1212, 2147483648
      %v1766 = vor.u32 1.1754944e-38, %v1765
      %v1767 = vsel %vm1764, %v1766, %v1762
      %v1768 = vmul.f32 1.0, %v1767
      %v1769 = vrcp.pop %v1213
      %v1770 = vmul.f32 %v1213, %v1769
      %v1771 = vsub.f32 1.0, %v1770
      %v1772 = vmul.f32 %v1769, %v1771
      %v1773 = vadd.f32 %v1769, %v1772
      %vm1774 = vweird.f32 %v1213
      %vm1775 = vweird.f32 %v1769
      %vm1776 = vmor %vm1774, %vm1775
      %v1777 = vsel %vm1776, %v1769, %v1773
      %v1778 = vand.u32 2147483647, %v1213
      %vm1779 = vcmp.eq.f32.partialorder %v1778, 8.507059e+37
      %v1780 = vand.u32 %v1213, 2147483648
      %v1781 = vor.u32 1.1754944e-38, %v1780
      %v1782 = vsel %vm1779, %v1781, %v1777
      %v1783 = vmul.f32 1.0, %v1782
      %v1784 = vmul.f32 %v1228, 1.0614054
      %v1785 = vmul.f32 %v1243, 1.0614054
      %v1786 = vmul.f32 %v1258, 1.0614054
      %v1787 = vmul.f32 %v1273, 1.0614054
      %v1788 = vmul.f32 %v1288, 1.0614054
      %v1789 = vmul.f32 %v1303, 1.0614054
      %v1790 = vmul.f32 %v1318, 1.0614054
      %v1791 = vmul.f32 %v1333, 1.0614054
      %v1792 = vmul.f32 %v1348, 1.0614054
      %v1793 = vmul.f32 %v1363, 1.0614054
      %v1794 = vmul.f32 %v1378, 1.0614054
      %v1795 = vmul.f32 %v1393, 1.0614054
      %v1796 = vmul.f32 %v1408, 1.0614054
      %v1797 = vmul.f32 %v1423, 1.0614054
      %v1798 = vmul.f32 %v1438, 1.0614054
      %v1799 = vmul.f32 %v1453, 1.0614054
      %v1800 = vmul.f32 %v1468, 1.0614054
      %v1801 = vmul.f32 %v1483, 1.0614054
      %v1802 = vmul.f32 %v1498, 1.0614054
      %v1803 = vmul.f32 %v1513, 1.0614054
      %v1804 = vmul.f32 %v1528, 1.0614054
      %v1805 = vmul.f32 %v1543, 1.0614054
      %v1806 = vmul.f32 %v1558, 1.0614054
      %v1807 = vmul.f32 %v1573, 1.0614054
      %v1808 = vmul.f32 %v1588, 1.0614054
      %v1809 = vmul.f32 %v1603, 1.0614054
      %v1810 = vmul.f32 %v1618, 1.0614054
      %v1811 = vmul.f32 %v1633, 1.0614054
      %v1812 = vmul.f32 %v1648, 1.0614054
      %v1813 = vmul.f32 %v1663, 1.0614054
      %v1814 = vmul.f32 %v1678, 1.0614054
      %v1815 = vmul.f32 %v1693, 1.0614054
      %v1816 = vmul.f32 %v1708, 1.0614054
      %v1817 = vmul.f32 %v1723, 1.0614054
      %v1818 = vmul.f32 %v1738, 1.0614054
      %v1819 = vmul.f32 %v1753, 1.0614054
      %v1820 = vmul.f32 %v1768, 1.0614054
      %v1821 = vmul.f32 %v1783, 1.0614054
      %v1822 = vadd.f32 %v1784, -1.4531521
      %v1823 = vadd.f32 %v1785, -1.4531521
      %v1824 = vadd.f32 %v1786, -1.4531521
      %v1825 = vadd.f32 %v1787, -1.4531521
      %v1826 = vadd.f32 %v1788, -1.4531521
      %v1827 = vadd.f32 %v1789, -1.4531521
      %v1828 = vadd.f32 %v1790, -1.4531521
      %v1829 = vadd.f32 %v1791, -1.4531521
      %v1830 = vadd.f32 %v1792, -1.4531521
      %v1831 = vadd.f32 %v1793, -1.4531521
      %v1832 = vadd.f32 %v1794, -1.4531521
      %v1833 = vadd.f32 %v1795, -1.4531521
      %v1834 = vadd.f32 %v1796, -1.4531521
      %v1835 = vadd.f32 %v1797, -1.4531521
      %v1836 = vadd.f32 %v1798, -1.4531521
      %v1837 = vadd.f32 %v1799, -1.4531521
      %v1838 = vadd.f32 %v1800, -1.4531521
      %v1839 = vadd.f32 %v1801, -1.4531521
      %v1840 = vadd.f32 %v1802, -1.4531521
      %v1841 = vadd.f32 %v1803, -1.4531521
      %v1842 = vadd.f32 %v1804, -1.4531521
      %v1843 = vadd.f32 %v1805, -1.4531521
      %v1844 = vadd.f32 %v1806, -1.4531521
      %v1845 = vadd.f32 %v1807, -1.4531521
      %v1846 = vadd.f32 %v1808, -1.4531521
      %v1847 = vadd.f32 %v1809, -1.4531521
      %v1848 = vadd.f32 %v1810, -1.4531521
      %v1849 = vadd.f32 %v1811, -1.4531521
      %v1850 = vadd.f32 %v1812, -1.4531521
      %v1851 = vadd.f32 %v1813, -1.4531521
      %v1852 = vadd.f32 %v1814, -1.4531521
      %v1853 = vadd.f32 %v1815, -1.4531521
      %v1854 = vadd.f32 %v1816, -1.4531521
      %v1855 = vadd.f32 %v1817, -1.4531521
      %v1856 = vadd.f32 %v1818, -1.4531521
      %v1857 = vadd.f32 %v1819, -1.4531521
      %v1858 = vadd.f32 %v1820, -1.4531521
      %v1859 = vadd.f32 %v1821, -1.4531521
      %v1860 = vmul.f32 %v1822, %v1228
      %v1861 = vmul.f32 %v1823, %v1243
      %v1862 = vmul.f32 %v1824, %v1258
      %v1863 = vmul.f32 %v1825, %v1273
      %v1864 = vmul.f32 %v1826, %v1288
      %v1865 = vmul.f32 %v1827, %v1303
      %v1866 = vmul.f32 %v1828, %v1318
      %v1867 = vmul.f32 %v1829, %v1333
      %v1868 = vmul.f32 %v1830, %v1348
      %v1869 = vmul.f32 %v1831, %v1363
      %v1870 = vmul.f32 %v1832, %v1378
      %v1871 = vmul.f32 %v1833, %v1393
      %v1872 = vmul.f32 %v1834, %v1408
      %v1873 = vmul.f32 %v1835, %v1423
      %v1874 = vmul.f32 %v1836, %v1438
      %v1875 = vmul.f32 %v1837, %v1453
      %v1876 = vmul.f32 %v1838, %v1468
      %v1877 = vmul.f32 %v1839, %v1483
      %v1878 = vmul.f32 %v1840, %v1498
      %v1879 = vmul.f32 %v1841, %v1513
      %v1880 = vmul.f32 %v1842, %v1528
      %v1881 = vmul.f32 %v1843, %v1543
      %v1882 = vmul.f32 %v1844, %v1558
      %v1883 = vmul.f32 %v1845, %v1573
      %v1884 = vmul.f32 %v1846, %v1588
      %v1885 = vmul.f32 %v1847, %v1603
      %v1886 = vmul.f32 %v1848, %v1618
      %v1887 = vmul.f32 %v1849, %v1633
      %v1888 = vmul.f32 %v1850, %v1648
      %v1889 = vmul.f32 %v1851, %v1663
      %v1890 = vmul.f32 %v1852, %v1678
      %v1891 = vmul.f32 %v1853, %v1693
      %v1892 = vmul.f32 %v1854, %v1708
      %v1893 = vmul.f32 %v1855, %v1723
      %v1894 = vmul.f32 %v1856, %v1738
      %v1895 = vmul.f32 %v1857, %v1753
      %v1896 = vmul.f32 %v1858, %v1768
      %v1897 = vmul.f32 %v1859, %v1783
      %v1898 = vadd.f32 %v1860, 1.4214138
      %v1899 = vadd.f32 %v1861, 1.4214138
      %v1900 = vadd.f32 %v1862, 1.4214138
      %v1901 = vadd.f32 %v1863, 1.4214138
      %v1902 = vadd.f32 %v1864, 1.4214138
      %v1903 = vadd.f32 %v1865, 1.4214138
      %v1904 = vadd.f32 %v1866, 1.4214138
      %v1905 = vadd.f32 %v1867, 1.4214138
      %v1906 = vadd.f32 %v1868, 1.4214138
      %v1907 = vadd.f32 %v1869, 1.4214138
      %v1908 = vadd.f32 %v1870, 1.4214138
      %v1909 = vadd.f32 %v1871, 1.4214138
      %v1910 = vadd.f32 %v1872, 1.4214138
      %v1911 = vadd.f32 %v1873, 1.4214138
      %v1912 = vadd.f32 %v1874, 1.4214138
      %v1913 = vadd.f32 %v1875, 1.4214138
      %v1914 = vadd.f32 %v1876, 1.4214138
      %v1915 = vadd.f32 %v1877, 1.4214138
      %v1916 = vadd.f32 %v1878, 1.4214138
      %v1917 = vadd.f32 %v1879, 1.4214138
      %v1918 = vadd.f32 %v1880, 1.4214138
      %v1919 = vadd.f32 %v1881, 1.4214138
      %v1920 = vadd.f32 %v1882, 1.4214138
      %v1921 = vadd.f32 %v1883, 1.4214138
      %v1922 = vadd.f32 %v1884, 1.4214138
      %v1923 = vadd.f32 %v1885, 1.4214138
      %v1924 = vadd.f32 %v1886, 1.4214138
      %v1925 = vadd.f32 %v1887, 1.4214138
      %v1926 = vadd.f32 %v1888, 1.4214138
      %v1927 = vadd.f32 %v1889, 1.4214138
      %v1928 = vadd.f32 %v1890, 1.4214138
      %v1929 = vadd.f32 %v1891, 1.4214138
      %v1930 = vadd.f32 %v1892, 1.4214138
      %v1931 = vadd.f32 %v1893, 1.4214138
      %v1932 = vadd.f32 %v1894, 1.4214138
      %v1933 = vadd.f32 %v1895, 1.4214138
      %v1934 = vadd.f32 %v1896, 1.4214138
      %v1935 = vadd.f32 %v1897, 1.4214138
      %v1936 = vmul.f32 %v1898, %v1228
      %v1937 = vmul.f32 %v1899, %v1243
      %v1938 = vmul.f32 %v1900, %v1258
      %v1939 = vmul.f32 %v1901, %v1273
      %v1940 = vmul.f32 %v1902, %v1288
      %v1941 = vmul.f32 %v1903, %v1303
      %v1942 = vmul.f32 %v1904, %v1318
      %v1943 = vmul.f32 %v1905, %v1333
      %v1944 = vmul.f32 %v1906, %v1348
      %v1945 = vmul.f32 %v1907, %v1363
      %v1946 = vmul.f32 %v1908, %v1378
      %v1947 = vmul.f32 %v1909, %v1393
      %v1948 = vmul.f32 %v1910, %v1408
      %v1949 = vmul.f32 %v1911, %v1423
      %v1950 = vmul.f32 %v1912, %v1438
      %v1951 = vmul.f32 %v1913, %v1453
      %v1952 = vmul.f32 %v1914, %v1468
      %v1953 = vmul.f32 %v1915, %v1483
      %v1954 = vmul.f32 %v1916, %v1498
      %v1955 = vmul.f32 %v1917, %v1513
      %v1956 = vmul.f32 %v1918, %v1528
      %v1957 = vmul.f32 %v1919, %v1543
      %v1958 = vmul.f32 %v1920, %v1558
      %v1959 = vmul.f32 %v1921, %v1573
      %v1960 = vmul.f32 %v1922, %v1588
      %v1961 = vmul.f32 %v1923, %v1603
      %v1962 = vmul.f32 %v1924, %v1618
      %v1963 = vmul.f32 %v1925, %v1633
      %v1964 = vmul.f32 %v1926, %v1648
      %v1965 = vmul.f32 %v1927, %v1663
      %v1966 = vmul.f32 %v1928, %v1678
      %v1967 = vmul.f32 %v1929, %v1693
      %v1968 = vmul.f32 %v1930, %v1708
      %v1969 = vmul.f32 %v1931, %v1723
      %v1970 = vmul.f32 %v1932, %v1738
      %v1971 = vmul.f32 %v1933, %v1753
      %v1972 = vmul.f32 %v1934, %v1768
      %v1973 = vmul.f32 %v1935, %v1783
      %v1974 = vadd.f32 %v1936, -0.28449672
      %v1975 = vadd.f32 %v1937, -0.28449672
      %v1976 = vadd.f32 %v1938, -0.28449672
      %v1977 = vadd.f32 %v1939, -0.28449672
      %v1978 = vadd.f32 %v1940, -0.28449672
      %v1979 = vadd.f32 %v1941, -0.28449672
      %v1980 = vadd.f32 %v1942, -0.28449672
      %v1981 = vadd.f32 %v1943, -0.28449672
      %v1982 = vadd.f32 %v1944, -0.28449672
      %v1983 = vadd.f32 %v1945, -0.28449672
      %v1984 = vadd.f32 %v1946, -0.28449672
      %v1985 = vadd.f32 %v1947, -0.28449672
      %v1986 = vadd.f32 %v1948, -0.28449672
      %v1987 = vadd.f32 %v1949, -0.28449672
      %v1988 = vadd.f32 %v1950, -0.28449672
      %v1989 = vadd.f32 %v1951, -0.28449672
      %v1990 = vadd.f32 %v1952, -0.28449672
      %v1991 = vadd.f32 %v1953, -0.28449672
      %v1992 = vadd.f32 %v1954, -0.28449672
      %v1993 = vadd.f32 %v1955, -0.28449672
      %v1994 = vadd.f32 %v1956, -0.28449672
      %v1995 = vadd.f32 %v1957, -0.28449672
      %v1996 = vadd.f32 %v1958, -0.28449672
      %v1997 = vadd.f32 %v1959, -0.28449672
      %v1998 = vadd.f32 %v1960, -0.28449672
      %v1999 = vadd.f32 %v1961, -0.28449672
      %v2000 = vadd.f32 %v1962, -0.28449672
      %v2001 = vadd.f32 %v1963, -0.28449672
      %v2002 = vadd.f32 %v1964, -0.28449672
      %v2003 = vadd.f32 %v1965, -0.28449672
      %v2004 = vadd.f32 %v1966, -0.28449672
      %v2005 = vadd.f32 %v1967, -0.28449672
      %v2006 = vadd.f32 %v1968, -0.28449672
      %v2007 = vadd.f32 %v1969, -0.28449672
      %v2008 = vadd.f32 %v1970, -0.28449672
      %v2009 = vadd.f32 %v1971, -0.28449672
      %v2010 = vadd.f32 %v1972, -0.28449672
      %v2011 = vadd.f32 %v1973, -0.28449672
      %v2012 = vmul.f32 %v1974, %v1228
      %v2013 = vmul.f32 %v1975, %v1243
      %v2014 = vmul.f32 %v1976, %v1258
      %v2015 = vmul.f32 %v1977, %v1273
      %v2016 = vmul.f32 %v1978, %v1288
      %v2017 = vmul.f32 %v1979, %v1303
      %v2018 = vmul.f32 %v1980, %v1318
      %v2019 = vmul.f32 %v1981, %v1333
      %v2020 = vmul.f32 %v1982, %v1348
      %v2021 = vmul.f32 %v1983, %v1363
      %v2022 = vmul.f32 %v1984, %v1378
      %v2023 = vmul.f32 %v1985, %v1393
      %v2024 = vmul.f32 %v1986, %v1408
      %v2025 = vmul.f32 %v1987, %v1423
      %v2026 = vmul.f32 %v1988, %v1438
      %v2027 = vmul.f32 %v1989, %v1453
      %v2028 = vmul.f32 %v1990, %v1468
      %v2029 = vmul.f32 %v1991, %v1483
      %v2030 = vmul.f32 %v1992, %v1498
      %v2031 = vmul.f32 %v1993, %v1513
      %v2032 = vmul.f32 %v1994, %v1528
      %v2033 = vmul.f32 %v1995, %v1543
      %v2034 = vmul.f32 %v1996, %v1558
      %v2035 = vmul.f32 %v1997, %v1573
      %v2036 = vmul.f32 %v1998, %v1588
      %v2037 = vmul.f32 %v1999, %v1603
      %v2038 = vmul.f32 %v2000, %v1618
      %v2039 = vmul.f32 %v2001, %v1633
      %v2040 = vmul.f32 %v2002, %v1648
      %v2041 = vmul.f32 %v2003, %v1663
      %v2042 = vmul.f32 %v2004, %v1678
      %v2043 = vmul.f32 %v2005, %v1693
      %v2044 = vmul.f32 %v2006, %v1708
      %v2045 = vmul.f32 %v2007, %v1723
      %v2046 = vmul.f32 %v2008, %v1738
      %v2047 = vmul.f32 %v2009, %v1753
      %v2048 = vmul.f32 %v2010, %v1768
      %v2049 = vmul.f32 %v2011, %v1783
      %v2050 = vadd.f32 %v2012, 0.2548296
      %v2051 = vadd.f32 %v2013, 0.2548296
      %v2052 = vadd.f32 %v2014, 0.2548296
      %v2053 = vadd.f32 %v2015, 0.2548296
      %v2054 = vadd.f32 %v2016, 0.2548296
      %v2055 = vadd.f32 %v2017, 0.2548296
      %v2056 = vadd.f32 %v2018, 0.2548296
      %v2057 = vadd.f32 %v2019, 0.2548296
      %v2058 = vadd.f32 %v2020, 0.2548296
      %v2059 = vadd.f32 %v2021, 0.2548296
      %v2060 = vadd.f32 %v2022, 0.2548296
      %v2061 = vadd.f32 %v2023, 0.2548296
      %v2062 = vadd.f32 %v2024, 0.2548296
      %v2063 = vadd.f32 %v2025, 0.2548296
      %v2064 = vadd.f32 %v2026, 0.2548296
      %v2065 = vadd.f32 %v2027, 0.2548296
      %v2066 = vadd.f32 %v2028, 0.2548296
      %v2067 = vadd.f32 %v2029, 0.2548296
      %v2068 = vadd.f32 %v2030, 0.2548296
      %v2069 = vadd.f32 %v2031, 0.2548296
      %v2070 = vadd.f32 %v2032, 0.2548296
      %v2071 = vadd.f32 %v2033, 0.2548296
      %v2072 = vadd.f32 %v2034, 0.2548296
      %v2073 = vadd.f32 %v2035, 0.2548296
      %v2074 = vadd.f32 %v2036, 0.2548296
      %v2075 = vadd.f32 %v2037, 0.2548296
      %v2076 = vadd.f32 %v2038, 0.2548296
      %v2077 = vadd.f32 %v2039, 0.2548296
      %v2078 = vadd.f32 %v2040, 0.2548296
      %v2079 = vadd.f32 %v2041, 0.2548296
      %v2080 = vadd.f32 %v2042, 0.2548296
      %v2081 = vadd.f32 %v2043, 0.2548296
      %v2082 = vadd.f32 %v2044, 0.2548296
      %v2083 = vadd.f32 %v2045, 0.2548296
      %v2084 = vadd.f32 %v2046, 0.2548296
      %v2085 = vadd.f32 %v2047, 0.2548296
      %v2086 = vadd.f32 %v2048, 0.2548296
      %v2087 = vadd.f32 %v2049, 0.2548296
      %v2088 = vmul.f32 %v2050, %v1228
      %v2089 = vmul.f32 %v2051, %v1243
      %v2090 = vmul.f32 %v2052, %v1258
      %v2091 = vmul.f32 %v2053, %v1273
      %v2092 = vmul.f32 %v2054, %v1288
      %v2093 = vmul.f32 %v2055, %v1303
      %v2094 = vmul.f32 %v2056, %v1318
      %v2095 = vmul.f32 %v2057, %v1333
      %v2096 = vmul.f32 %v2058, %v1348
      %v2097 = vmul.f32 %v2059, %v1363
      %v2098 = vmul.f32 %v2060, %v1378
      %v2099 = vmul.f32 %v2061, %v1393
      %v2100 = vmul.f32 %v2062, %v1408
      %v2101 = vmul.f32 %v2063, %v1423
      %v2102 = vmul.f32 %v2064, %v1438
      %v2103 = vmul.f32 %v2065, %v1453
      %v2104 = vmul.f32 %v2066, %v1468
      %v2105 = vmul.f32 %v2067, %v1483
      %v2106 = vmul.f32 %v2068, %v1498
      %v2107 = vmul.f32 %v2069, %v1513
      %v2108 = vmul.f32 %v2070, %v1528
      %v2109 = vmul.f32 %v2071, %v1543
      %v2110 = vmul.f32 %v2072, %v1558
      %v2111 = vmul.f32 %v2073, %v1573
      %v2112 = vmul.f32 %v2074, %v1588
      %v2113 = vmul.f32 %v2075, %v1603
      %v2114 = vmul.f32 %v2076, %v1618
      %v2115 = vmul.f32 %v2077, %v1633
      %v2116 = vmul.f32 %v2078, %v1648
      %v2117 = vmul.f32 %v2079, %v1663
      %v2118 = vmul.f32 %v2080, %v1678
      %v2119 = vmul.f32 %v2081, %v1693
      %v2120 = vmul.f32 %v2082, %v1708
      %v2121 = vmul.f32 %v2083, %v1723
      %v2122 = vmul.f32 %v2084, %v1738
      %v2123 = vmul.f32 %v2085, %v1753
      %v2124 = vmul.f32 %v2086, %v1768
      %v2125 = vmul.f32 %v2087, %v1783
      %v2126 = vsub.f32 0.0, %v1100
      %v2127 = vsub.f32 0.0, %v1101
      %v2128 = vsub.f32 0.0, %v1102
      %v2129 = vsub.f32 0.0, %v1103
      %v2130 = vsub.f32 0.0, %v1104
      %v2131 = vsub.f32 0.0, %v1105
      %v2132 = vsub.f32 0.0, %v1106
      %v2133 = vsub.f32 0.0, %v1107
      %v2134 = vsub.f32 0.0, %v1108
      %v2135 = vsub.f32 0.0, %v1109
      %v2136 = vsub.f32 0.0, %v1110
      %v2137 = vsub.f32 0.0, %v1111
      %v2138 = vsub.f32 0.0, %v1112
      %v2139 = vsub.f32 0.0, %v1113
      %v2140 = vsub.f32 0.0, %v1114
      %v2141 = vsub.f32 0.0, %v1115
      %v2142 = vsub.f32 0.0, %v1116
      %v2143 = vsub.f32 0.0, %v1117
      %v2144 = vsub.f32 0.0, %v1118
      %v2145 = vsub.f32 0.0, %v1119
      %v2146 = vsub.f32 0.0, %v1120
      %v2147 = vsub.f32 0.0, %v1121
      %v2148 = vsub.f32 0.0, %v1122
      %v2149 = vsub.f32 0.0, %v1123
      %v2150 = vsub.f32 0.0, %v1124
      %v2151 = vsub.f32 0.0, %v1125
      %v2152 = vsub.f32 0.0, %v1126
      %v2153 = vsub.f32 0.0, %v1127
      %v2154 = vsub.f32 0.0, %v1128
      %v2155 = vsub.f32 0.0, %v1129
      %v2156 = vsub.f32 0.0, %v1130
      %v2157 = vsub.f32 0.0, %v1131
      %v2158 = vsub.f32 0.0, %v1132
      %v2159 = vsub.f32 0.0, %v1133
      %v2160 = vsub.f32 0.0, %v1134
      %v2161 = vsub.f32 0.0, %v1135
      %v2162 = vsub.f32 0.0, %v1136
      %v2163 = vsub.f32 0.0, %v1137
      %v2164 = vmul.f32 %v2126, %v1100
      %v2165 = vmul.f32 %v2127, %v1101
      %v2166 = vmul.f32 %v2128, %v1102
      %v2167 = vmul.f32 %v2129, %v1103
      %v2168 = vmul.f32 %v2130, %v1104
      %v2169 = vmul.f32 %v2131, %v1105
      %v2170 = vmul.f32 %v2132, %v1106
      %v2171 = vmul.f32 %v2133, %v1107
      %v2172 = vmul.f32 %v2134, %v1108
      %v2173 = vmul.f32 %v2135, %v1109
      %v2174 = vmul.f32 %v2136, %v1110
      %v2175 = vmul.f32 %v2137, %v1111
      %v2176 = vmul.f32 %v2138, %v1112
      %v2177 = vmul.f32 %v2139, %v1113
      %v2178 = vmul.f32 %v2140, %v1114
      %v2179 = vmul.f32 %v2141, %v1115
      %v2180 = vmul.f32 %v2142, %v1116
      %v2181 = vmul.f32 %v2143, %v1117
      %v2182 = vmul.f32 %v2144, %v1118
      %v2183 = vmul.f32 %v2145, %v1119
      %v2184 = vmul.f32 %v2146, %v1120
      %v2185 = vmul.f32 %v2147, %v1121
      %v2186 = vmul.f32 %v2148, %v1122
      %v2187 = vmul.f32 %v2149, %v1123
      %v2188 = vmul.f32 %v2150, %v1124
      %v2189 = vmul.f32 %v2151, %v1125
      %v2190 = vmul.f32 %v2152, %v1126
      %v2191 = vmul.f32 %v2153, %v1127
      %v2192 = vmul.f32 %v2154, %v1128
      %v2193 = vmul.f32 %v2155, %v1129
      %v2194 = vmul.f32 %v2156, %v1130
      %v2195 = vmul.f32 %v2157, %v1131
      %v2196 = vmul.f32 %v2158, %v1132
      %v2197 = vmul.f32 %v2159, %v1133
      %v2198 = vmul.f32 %v2160, %v1134
      %v2199 = vmul.f32 %v2161, %v1135
      %v2200 = vmul.f32 %v2162, %v1136
      %v2201 = vmul.f32 %v2163, %v1137
      %v2202 = vmul.f32 %v2164, 1.442695
      %v2203 = vpow.pop %v2202
      %v2204 = vmul.f32 %v2165, 1.442695
      %v2205 = vpow.pop %v2204
      %v2206 = vmul.f32 %v2166, 1.442695
      %v2207 = vpow.pop %v2206
      %v2208 = vmul.f32 %v2167, 1.442695
      %v2209 = vpow.pop %v2208
      %v2210 = vmul.f32 %v2168, 1.442695
      %v2211 = vpow.pop %v2210
      %v2212 = vmul.f32 %v2169, 1.442695
      %v2213 = vpow.pop %v2212
      %v2214 = vmul.f32 %v2170, 1.442695
      %v2215 = vpow.pop %v2214
      %v2216 = vmul.f32 %v2171, 1.442695
      %v2217 = vpow.pop %v2216
      %v2218 = vmul.f32 %v2172, 1.442695
      %v2219 = vpow.pop %v2218
      %v2220 = vmul.f32 %v2173, 1.442695
      %v2221 = vpow.pop %v2220
      %v2222 = vmul.f32 %v2174, 1.442695
      %v2223 = vpow.pop %v2222
      %v2224 = vmul.f32 %v2175, 1.442695
      %v2225 = vpow.pop %v2224
      %v2226 = vmul.f32 %v2176, 1.442695
      %v2227 = vpow.pop %v2226
      %v2228 = vmul.f32 %v2177, 1.442695
      %v2229 = vpow.pop %v2228
      %v2230 = vmul.f32 %v2178, 1.442695
      %v2231 = vpow.pop %v2230
      %v2232 = vmul.f32 %v2179, 1.442695
      %v2233 = vpow.pop %v2232
      %v2234 = vmul.f32 %v2180, 1.442695
      %v2235 = vpow.pop %v2234
      %v2236 = vmul.f32 %v2181, 1.442695
      %v2237 = vpow.pop %v2236
      %v2238 = vmul.f32 %v2182, 1.442695
      %v2239 = vpow.pop %v2238
      %v2240 = vmul.f32 %v2183, 1.442695
      %v2241 = vpow.pop %v2240
      %v2242 = vmul.f32 %v2184, 1.442695
      %v2243 = vpow.pop %v2242
      %v2244 = vmul.f32 %v2185, 1.442695
      %v2245 = vpow.pop %v2244
      %v2246 = vmul.f32 %v2186, 1.442695
      %v2247 = vpow.pop %v2246
      %v2248 = vmul.f32 %v2187, 1.442695
      %v2249 = vpow.pop %v2248
      %v2250 = vmul.f32 %v2188, 1.442695
      %v2251 = vpow.pop %v2250
      %v2252 = vmul.f32 %v2189, 1.442695
      %v2253 = vpow.pop %v2252
      %v2254 = vmul.f32 %v2190, 1.442695
      %v2255 = vpow.pop %v2254
      %v2256 = vmul.f32 %v2191, 1.442695
      %v2257 = vpow.pop %v2256
      %v2258 = vmul.f32 %v2192, 1.442695
      %v2259 = vpow.pop %v2258
      %v2260 = vmul.f32 %v2193, 1.442695
      %v2261 = vpow.pop %v2260
      %v2262 = vmul.f32 %v2194, 1.442695
      %v2263 = vpow.pop %v2262
      %v2264 = vmul.f32 %v2195, 1.442695
      %v2265 = vpow.pop %v2264
      %v2266 = vmul.f32 %v2196, 1.442695
      %v2267 = vpow.pop %v2266
      %v2268 = vmul.f32 %v2197, 1.442695
      %v2269 = vpow.pop %v2268
      %v2270 = vmul.f32 %v2198, 1.442695
      %v2271 = vpow.pop %v2270
      %v2272 = vmul.f32 %v2199, 1.442695
      %v2273 = vpow.pop %v2272
      %v2274 = vmul.f32 %v2200, 1.442695
      %v2275 = vpow.pop %v2274
      %v2276 = vmul.f32 %v2201, 1.442695
      %v2277 = vpow.pop %v2276
      %v2278 = vmul.f32 %v2088, %v2203
      %v2279 = vmul.f32 %v2089, %v2205
      %v2280 = vmul.f32 %v2090, %v2207
      %v2281 = vmul.f32 %v2091, %v2209
      %v2282 = vmul.f32 %v2092, %v2211
      %v2283 = vmul.f32 %v2093, %v2213
      %v2284 = vmul.f32 %v2094, %v2215
      %v2285 = vmul.f32 %v2095, %v2217
      %v2286 = vmul.f32 %v2096, %v2219
      %v2287 = vmul.f32 %v2097, %v2221
      %v2288 = vmul.f32 %v2098, %v2223
      %v2289 = vmul.f32 %v2099, %v2225
      %v2290 = vmul.f32 %v2100, %v2227
      %v2291 = vmul.f32 %v2101, %v2229
      %v2292 = vmul.f32 %v2102, %v2231
      %v2293 = vmul.f32 %v2103, %v2233
      %v2294 = vmul.f32 %v2104, %v2235
      %v2295 = vmul.f32 %v2105, %v2237
      %v2296 = vmul.f32 %v2106, %v2239
      %v2297 = vmul.f32 %v2107, %v2241
      %v2298 = vmul.f32 %v2108, %v2243
      %v2299 = vmul.f32 %v2109, %v2245
      %v2300 = vmul.f32 %v2110, %v2247
      %v2301 = vmul.f32 %v2111, %v2249
      %v2302 = vmul.f32 %v2112, %v2251
      %v2303 = vmul.f32 %v2113, %v2253
      %v2304 = vmul.f32 %v2114, %v2255
      %v2305 = vmul.f32 %v2115, %v2257
      %v2306 = vmul.f32 %v2116, %v2259
      %v2307 = vmul.f32 %v2117, %v2261
      %v2308 = vmul.f32 %v2118, %v2263
      %v2309 = vmul.f32 %v2119, %v2265
      %v2310 = vmul.f32 %v2120, %v2267
      %v2311 = vmul.f32 %v2121, %v2269
      %v2312 = vmul.f32 %v2122, %v2271
      %v2313 = vmul.f32 %v2123, %v2273
      %v2314 = vmul.f32 %v2124, %v2275
      %v2315 = vmul.f32 %v2125, %v2277
      %v2316 = vsub.f32 1.0, %v2278
      %v2317 = vsub.f32 1.0, %v2279
      %v2318 = vsub.f32 1.0, %v2280
      %v2319 = vsub.f32 1.0, %v2281
      %v2320 = vsub.f32 1.0, %v2282
      %v2321 = vsub.f32 1.0, %v2283
      %v2322 = vsub.f32 1.0, %v2284
      %v2323 = vsub.f32 1.0, %v2285
      %v2324 = vsub.f32 1.0, %v2286
      %v2325 = vsub.f32 1.0, %v2287
      %v2326 = vsub.f32 1.0, %v2288
      %v2327 = vsub.f32 1.0, %v2289
      %v2328 = vsub.f32 1.0, %v2290
      %v2329 = vsub.f32 1.0, %v2291
      %v2330 = vsub.f32 1.0, %v2292
      %v2331 = vsub.f32 1.0, %v2293
      %v2332 = vsub.f32 1.0, %v2294
      %v2333 = vsub.f32 1.0, %v2295
      %v2334 = vsub.f32 1.0, %v2296
      %v2335 = vsub.f32 1.0, %v2297
      %v2336 = vsub.f32 1.0, %v2298
      %v2337 = vsub.f32 1.0, %v2299
      %v2338 = vsub.f32 1.0, %v2300
      %v2339 = vsub.f32 1.0, %v2301
      %v2340 = vsub.f32 1.0, %v2302
      %v2341 = vsub.f32 1.0, %v2303
      %v2342 = vsub.f32 1.0, %v2304
      %v2343 = vsub.f32 1.0, %v2305
      %v2344 = vsub.f32 1.0, %v2306
      %v2345 = vsub.f32 1.0, %v2307
      %v2346 = vsub.f32 1.0, %v2308
      %v2347 = vsub.f32 1.0, %v2309
      %v2348 = vsub.f32 1.0, %v2310
      %v2349 = vsub.f32 1.0, %v2311
      %v2350 = vsub.f32 1.0, %v2312
      %v2351 = vsub.f32 1.0, %v2313
      %v2352 = vsub.f32 1.0, %v2314
      %v2353 = vsub.f32 1.0, %v2315
      %v2354 = vmul.f32 %v1062, %v2316
      %v2355 = vmul.f32 %v1063, %v2317
      %v2356 = vmul.f32 %v1064, %v2318
      %v2357 = vmul.f32 %v1065, %v2319
      %v2358 = vmul.f32 %v1066, %v2320
      %v2359 = vmul.f32 %v1067, %v2321
      %v2360 = vmul.f32 %v1068, %v2322
      %v2361 = vmul.f32 %v1069, %v2323
      %v2362 = vmul.f32 %v1070, %v2324
      %v2363 = vmul.f32 %v1071, %v2325
      %v2364 = vmul.f32 %v1072, %v2326
      %v2365 = vmul.f32 %v1073, %v2327
      %v2366 = vmul.f32 %v1074, %v2328
      %v2367 = vmul.f32 %v1075, %v2329
      %v2368 = vmul.f32 %v1076, %v2330
      %v2369 = vmul.f32 %v1077, %v2331
      %v2370 = vmul.f32 %v1078, %v2332
      %v2371 = vmul.f32 %v1079, %v2333
      %v2372 = vmul.f32 %v1080, %v2334
      %v2373 = vmul.f32 %v1081, %v2335
      %v2374 = vmul.f32 %v1082, %v2336
      %v2375 = vmul.f32 %v1083, %v2337
      %v2376 = vmul.f32 %v1084, %v2338
      %v2377 = vmul.f32 %v1085, %v2339
      %v2378 = vmul.f32 %v1086, %v2340
      %v2379 = vmul.f32 %v1087, %v2341
      %v2380 = vmul.f32 %v1088, %v2342
      %v2381 = vmul.f32 %v1089, %v2343
      %v2382 = vmul.f32 %v1090, %v2344
      %v2383 = vmul.f32 %v1091, %v2345
      %v2384 = vmul.f32 %v1092, %v2346
      %v2385 = vmul.f32 %v1093, %v2347
      %v2386 = vmul.f32 %v1094, %v2348
      %v2387 = vmul.f32 %v1095, %v2349
      %v2388 = vmul.f32 %v1096, %v2350
      %v2389 = vmul.f32 %v1097, %v2351
      %v2390 = vmul.f32 %v1098, %v2352
      %v2391 = vmul.f32 %v1099, %v2353
      %v2392 = vadd.f32 %v2354, 1.0
      %v2393 = vadd.f32 %v2355, 1.0
      %v2394 = vadd.f32 %v2356, 1.0
      %v2395 = vadd.f32 %v2357, 1.0
      %v2396 = vadd.f32 %v2358, 1.0
      %v2397 = vadd.f32 %v2359, 1.0
      %v2398 = vadd.f32 %v2360, 1.0
      %v2399 = vadd.f32 %v2361, 1.0
      %v2400 = vadd.f32 %v2362, 1.0
      %v2401 = vadd.f32 %v2363, 1.0
      %v2402 = vadd.f32 %v2364, 1.0
      %v2403 = vadd.f32 %v2365, 1.0
      %v2404 = vadd.f32 %v2366, 1.0
      %v2405 = vadd.f32 %v2367, 1.0
      %v2406 = vadd.f32 %v2368, 1.0
      %v2407 = vadd.f32 %v2369, 1.0
      %v2408 = vadd.f32 %v2370, 1.0
      %v2409 = vadd.f32 %v2371, 1.0
      %v2410 = vadd.f32 %v2372, 1.0
      %v2411 = vadd.f32 %v2373, 1.0
      %v2412 = vadd.f32 %v2374, 1.0
      %v2413 = vadd.f32 %v2375, 1.0
      %v2414 = vadd.f32 %v2376, 1.0
      %v2415 = vadd.f32 %v2377, 1.0
      %v2416 = vadd.f32 %v2378, 1.0
      %v2417 = vadd.f32 %v2379, 1.0
      %v2418 = vadd.f32 %v2380, 1.0
      %v2419 = vadd.f32 %v2381, 1.0
      %v2420 = vadd.f32 %v2382, 1.0
      %v2421 = vadd.f32 %v2383, 1.0
      %v2422 = vadd.f32 %v2384, 1.0
      %v2423 = vadd.f32 %v2385, 1.0
      %v2424 = vadd.f32 %v2386, 1.0
      %v2425 = vadd.f32 %v2387, 1.0
      %v2426 = vadd.f32 %v2388, 1.0
      %v2427 = vadd.f32 %v2389, 1.0
      %v2428 = vadd.f32 %v2390, 1.0
      %v2429 = vadd.f32 %v2391, 1.0
      %v2430 = vmul.f32 %v948, %v2392
      %v2431 = vmul.f32 %v949, %v2393
      %v2432 = vmul.f32 %v950, %v2394
      %v2433 = vmul.f32 %v951, %v2395
      %v2434 = vmul.f32 %v952, %v2396
      %v2435 = vmul.f32 %v953, %v2397
      %v2436 = vmul.f32 %v954, %v2398
      %v2437 = vmul.f32 %v955, %v2399
      %v2438 = vmul.f32 %v956, %v2400
      %v2439 = vmul.f32 %v957, %v2401
      %v2440 = vmul.f32 %v958, %v2402
      %v2441 = vmul.f32 %v959, %v2403
      %v2442 = vmul.f32 %v960, %v2404
      %v2443 = vmul.f32 %v961, %v2405
      %v2444 = vmul.f32 %v962, %v2406
      %v2445 = vmul.f32 %v963, %v2407
      %v2446 = vmul.f32 %v964, %v2408
      %v2447 = vmul.f32 %v965, %v2409
      %v2448 = vmul.f32 %v966, %v2410
      %v2449 = vmul.f32 %v967, %v2411
      %v2450 = vmul.f32 %v968, %v2412
      %v2451 = vmul.f32 %v969, %v2413
      %v2452 = vmul.f32 %v970, %v2414
      %v2453 = vmul.f32 %v971, %v2415
      %v2454 = vmul.f32 %v972, %v2416
      %v2455 = vmul.f32 %v973, %v2417
      %v2456 = vmul.f32 %v974, %v2418
      %v2457 = vmul.f32 %v975, %v2419
      %v2458 = vmul.f32 %v976, %v2420
      %v2459 = vmul.f32 %v977, %v2421
      %v2460 = vmul.f32 %v978, %v2422
      %v2461 = vmul.f32 %v979, %v2423
      %v2462 = vmul.f32 %v980, %v2424
      %v2463 = vmul.f32 %v981, %v2425
      %v2464 = vmul.f32 %v982, %v2426
      %v2465 = vmul.f32 %v983, %v2427
      %v2466 = vmul.f32 %v984, %v2428
      %v2467 = vmul.f32 %v985, %v2429
      %2468 = vst.msk [vmem:[%s273] sm:$0xff] %vm608, %v2430
      %2469 = vst.msk [vmem:[%s273 + $0x8] sm:$0xff] %vm608, %v2431
      %2470 = vst.msk [vmem:[%s273 + $0x10] sm:$0xff] %vm608, %v2432
      %2471 = vst.msk [vmem:[%s273 + $0x18] sm:$0xff] %vm608, %v2433
      %2472 = vst.msk [vmem:[%s273 + $0x20] sm:$0xff] %vm608, %v2434
      %2473 = vst.msk [vmem:[%s273 + $0x28] sm:$0xff] %vm608, %v2435
      %2474 = vst.msk [vmem:[%s273 + $0x30] sm:$0xff] %vm608, %v2436
      %2475 = vst.msk [vmem:[%s273 + $0x38] sm:$0xff] %vm608, %v2437
      %2476 = vst.msk [vmem:[%s273 + $0x40] sm:$0xff] %vm608, %v2438
      %2477 = vst.msk [vmem:[%s273 + $0x48] sm:$0xff] %vm608, %v2439
      %2478 = vst.msk [vmem:[%s273 + $0x50] sm:$0xff] %vm608, %v2440
      %2479 = vst.msk [vmem:[%s273 + $0x58] sm:$0xff] %vm608, %v2441
      %2480 = vst.msk [vmem:[%s273 + $0x60] sm:$0xff] %vm608, %v2442
      %2481 = vst.msk [vmem:[%s273 + $0x68] sm:$0xff] %vm608, %v2443
      %2482 = vst.msk [vmem:[%s273 + $0x70] sm:$0xff] %vm608, %v2444
      %2483 = vst.msk [vmem:[%s273 + $0x78] sm:$0xff] %vm608, %v2445
      %2484 = vst.msk [vmem:[%s273 + $0x80] sm:$0xff] %vm608, %v2446
      %2485 = vst.msk [vmem:[%s273 + $0x88] sm:$0xff] %vm608, %v2447
      %2486 = vst.msk [vmem:[%s273 + $0x90] sm:$0xff] %vm608, %v2448
      %2487 = vst.msk [vmem:[%s273 + $0x98] sm:$0xff] %vm608, %v2449
      %2488 = vst.msk [vmem:[%s273 + $0xa0] sm:$0xff] %vm608, %v2450
      %2489 = vst.msk [vmem:[%s273 + $0xa8] sm:$0xff] %vm608, %v2451
      %2490 = vst.msk [vmem:[%s273 + $0xb0] sm:$0xff] %vm608, %v2452
      %2491 = vst.msk [vmem:[%s273 + $0xb8] sm:$0xff] %vm608, %v2453
      %2492 = vst.msk [vmem:[%s273 + $0xc0] sm:$0xff] %vm608, %v2454
      %2493 = vst.msk [vmem:[%s273 + $0xc8] sm:$0xff] %vm608, %v2455
      %2494 = vst.msk [vmem:[%s273 + $0xd0] sm:$0xff] %vm608, %v2456
      %2495 = vst.msk [vmem:[%s273 + $0xd8] sm:$0xff] %vm608, %v2457
      %2496 = vst.msk [vmem:[%s273 + $0xe0] sm:$0xff] %vm608, %v2458
      %2497 = vst.msk [vmem:[%s273 + $0xe8] sm:$0xff] %vm608, %v2459
      %2498 = vst.msk [vmem:[%s273 + $0xf0] sm:$0xff] %vm608, %v2460
      %2499 = vst.msk [vmem:[%s273 + $0xf8] sm:$0xff] %vm608, %v2461
      %2500 = vst.msk [vmem:[%s273 + $0x100] sm:$0xff] %vm608, %v2462
      %2501 = vst.msk [vmem:[%s273 + $0x108] sm:$0xff] %vm608, %v2463
      %2502 = vst.msk [vmem:[%s273 + $0x110] sm:$0xff] %vm608, %v2464
      %2503 = vst.msk [vmem:[%s273 + $0x118] sm:$0xff] %vm608, %v2465
      %2504 = vst.msk [vmem:[%s273 + $0x120] sm:$0xff] %vm608, %v2466
      %2505 = vst.msk [vmem:[%s273 + $0x128] sm:$0xff] %vm608, %v2467
      %s2506 = smul.u32 %s22, %s23
      %s2507 = smul.u32 38, %s2506
      %p2508 = scmp.lt.s32.totalorder %s21, 1
      %s2509 = scalar_select %p2508, %s21, 1
      %p2510 = scmp.lt.s32.totalorder %s2507, 37
      %s2511 = scalar_select %p2510, %s2507, 37
      %s2512 = smul.addr %s2509, 38
      %s2513 = sadd.s32 %s2511, %s2512
      %s2514 = smul.addr %s2513, 8
      %s2515 = scalar_lea.vmem %s5, %s2514
      // Predicated region
      $region41: #{tpu_custom_call.1} parent=39 // pred_check
        %p2516 = pneg %p169
      $region42: #{tpu_custom_call.1} parent=39 // pred_check_branch
        %2518 = sbr.rel (%p2516) target = $region44
      $region43: #{tpu_custom_call.1} parent=39 // pred_region
        %s2519 = smul.u32 %s22, %s23
        %s2520 = smul.u32 38, %s2519
      $region44: #{tpu_custom_call.1} parent=39 // pred_fallthru
        _
    $region40: #{tpu_custom_call.1} parent=5 // pred_fallthru
      _
    %p2521 = scmp.le.s32.totalorder 2, %s11
    // Predicated region
    $region45: #{tpu_custom_call.1} parent=5 // pred_check
      %p2522 = pneg %p2521
    $region46: #{tpu_custom_call.1} parent=5 // pred_check_branch
      %2524 = sbr.rel (%p2522) target = $region48
    $region47: #{tpu_custom_call.1} parent=5 // pred_region
      %s2525 = ssub.s32 %s11, 2
      // Predicated region
      $region49: #{tpu_custom_call.1} parent=47 // pred_check
        %p2526 = pneg %p175
      $region50: #{tpu_custom_call.1} parent=47 // pred_check_branch
        %2528 = sbr.rel (%p2526) target = $region52
      $region51: #{tpu_custom_call.1} parent=47 // pred_region
        %s2529 = smul.u32 %s25, %s26
        %s2530 = smul.u32 38, %s2529
        %p2531 = scmp.lt.s32.totalorder %s24, 1
        %s2532 = scalar_select %p2531, %s24, 1
        %p2533 = scmp.lt.s32.totalorder %s2530, 37
        %s2534 = scalar_select %p2533, %s2530, 37
        %s2535 = smul.addr %s2532, 38
        %s2536 = sadd.s32 %s2534, %s2535
        %s2537 = smul.addr %s2536, 8
        %s2538 = scalar_lea.vmem %s5, %s2537
      $region52: #{tpu_custom_call.1} parent=47 // pred_fallthru
        _
    $region48: #{tpu_custom_call.1} parent=5 // pred_fallthru
      _
  $region6: #{tpu_custom_call.1} parent=0 // loop_footer
    %s15 = sadd.s32 1, %s11
  $region7: #{tpu_custom_call.1} parent=0 // loop_footer_branch
    %10 = sbr.rel target = $region3
  $region8: #{tpu_custom_call.1} parent=0 // loop_exit
    _

</llo_original>
